<compile_context>
chip_gen: v6e
topology: v6e:2x2x1
jax: 0.10.0
libtpu: 0.0.40
codegen_flags: <defaults>
</compile_context>

<pallas_src>
import numpy as np
import jax
import jax.numpy as jnp
from jax import lax
from jax.experimental import pallas as pl
from jax.experimental.pallas import tpu as pltpu


def _round_up(x, m):
    return ((x + m - 1) // m) * m


def _bev_pool_kernel(tbl_ref,    # SMEM (num_out_tiles*K,) i32  (drives index_maps)
                     nv_ref,     # SMEM (num_out_tiles,)   i32  valid point-tiles per row tile
                     rows_ref,   # VMEM (1, P)  i32  bev row per point (-1 for padding)
                     w_ref,      # VMEM (1, P)  f32  depth weight per point
                     src_ref,    # VMEM (P, C_pad) bf16/f32  gathered camera features per point
                     out_ref):   # VMEM (R, C_pad) f32  resident accumulator for row tile i
    i = pl.program_id(0)
    k = pl.program_id(1)
    R = out_ref.shape[0]

    # Zero this output-row tile once (cells never hit stay 0; also covers the
    # "no points / no intervals" case).
    @pl.when(k == 0)
    def _():
        out_ref[...] = jnp.zeros_like(out_ref)

    # Skip compute for padded table entries (they repeat the last valid point
    # tile, so the BlockSpec DMA is also skipped -> no redundant HBM traffic).
    @pl.when(k < nv_ref[i])
    def _():
        rows = rows_ref[...]                                 # (1, P) i32
        wts = w_ref[...]                                     # (1, P) f32
        local = rows - i * R                                 # (1, P)
        row_ids = lax.broadcasted_iota(jnp.int32, (R, 1), 0)
        sel = local == row_ids                               # (R, P) via broadcast
        m = jnp.where(sel, wts, 0.0)                         # f32 masked weights (R, P)
        out_ref[...] += jnp.dot(m.astype(src_ref.dtype),     # MXU: bf16 x bf16 -> f32 acc
                                src_ref[...],
                                preferred_element_type=jnp.float32)


def bev_pool_v2_pallas(depth, feat, ranks_depth, ranks_feat, ranks_bev,
                       bev_feat_shape, interval_starts=None, interval_lengths=None,
                       *, row_tile=128, point_tile=1024, feat_dtype=jnp.bfloat16):
    """Pallas TPU implementation of bev_pool_v2 forward.

    interval_starts / interval_lengths are accepted for API parity but not
    needed: the pooling is expressed as a (sorted) scatter-add over points,
    which equals the per-interval sum-assignment of the CUDA kernel under its
    own precondition (each BEV cell belongs to at most one interval and the
    intervals cover exactly the supplied points).

    `feat_dtype=jnp.bfloat16` (default) streams the gathered features and the
    masked weight matrix through the MXU in bf16 with f32 accumulation; pass
    jnp.float32 for bit-closer-to-CUDA numerics at ~2x the HBM traffic.
    """
    del interval_starts, interval_lengths

    B, Dz, Dy, Dx, C = (int(s) for s in bev_feat_shape)
    n_bev = B * Dz * Dy * Dx
    R = int(row_tile)
    P = int(point_tile)
    C_pad = _round_up(max(C, 1), 128)
    n_bev_pad = _round_up(max(n_bev, 1), R)
    num_out_tiles = n_bev_pad // R

    depth_flat = depth.reshape(-1).astype(jnp.float32)
    feat2d = feat.reshape(-1, C).astype(feat_dtype)
    # Pad channels on the (small) camera-feature table BEFORE the gather, so the
    # big per-point array is materialized exactly once at its final shape.
    feat2d_pad = jnp.pad(feat2d, ((0, 0), (0, C_pad - C)))

    rd = ranks_depth.astype(jnp.int32)
    rf = ranks_feat.astype(jnp.int32)
    rb = ranks_bev.astype(jnp.int32)

    N = int(rd.shape[0])
    num_pt_tiles = max(1, -(-N // P))
    n_pts_pad = num_pt_tiles * P
    pad = n_pts_pad - N

    # ---- Vectorized gathers outside the kernel (no per-point scalar loads). ----
    rd_pad = jnp.pad(rd, (0, pad))                    # padded indices point at 0 (valid);
    rf_pad = jnp.pad(rf, (0, pad))                    # the mask zeroes them via rows == -1.
    w_pad = depth_flat[rd_pad].reshape(1, n_pts_pad)                         # (1, n_pts_pad) f32
    rows_pad = jnp.pad(rb, (0, pad), constant_values=-1).reshape(1, n_pts_pad)
    src_pad = feat2d_pad[rf_pad]                                             # (n_pts_pad, C_pad) bf16

    # ---- Host-side routing table: which point tiles touch which row tile. ----
    # ranks_bev is sorted in BEVDet prep, so each point tile spans a small
    # contiguous range of row tiles; correctness does not depend on sortedness.
    try:
        rb_host = np.asarray(jax.device_get(rb), dtype=np.int64)
    except Exception as e:  # e.g. traced under jit
        raise ValueError(
            "bev_pool_v2_pallas needs concrete (non-traced) rank tensors to build "
            "its routing table, matching the CUDA op's precomputed-index usage."
        ) from e

    rows_host = np.full((n_pts_pad,), -1, dtype=np.int64)
    if N:
        rows_host[:N] = rb_host
    tiled = rows_host.reshape(num_pt_tiles, P)
    real = tiled >= 0
    has_real = real.any(axis=1)
    big = np.iinfo(np.int64).max
    rmin = np.where(real, tiled, big).min(axis=1)
    rmax = np.where(real, tiled, -1).max(axis=1)
    lo = np.where(has_real, rmin // R, 0)
    hi = np.where(has_real, rmax // R, -1)

    entries = [[] for _ in range(num_out_tiles)]
    for t in range(num_pt_tiles):
        if not has_real[t]:
            continue
        for i_row in range(int(lo[t]), int(hi[t]) + 1):
            entries[i_row].append(t)
    K = max(1, max((len(e) for e in entries), default=0))

    tbl_np = np.zeros((num_out_tiles, K), dtype=np.int32)
    nv_np = np.zeros((num_out_tiles,), dtype=np.int32)
    for i_row, e in enumerate(entries):
        nv_np[i_row] = len(e)
        if e:
            tbl_np[i_row, :len(e)] = np.asarray(e, dtype=np.int32)
            # Repeat-last padding: padded k-steps keep the same block index, so
            # Pallas skips the (P, C_pad) HBM->VMEM refetch entirely.
            tbl_np[i_row, len(e):] = e[-1]
    tbl_flat = jnp.asarray(tbl_np.reshape(-1))        # (num_out_tiles*K,) i32, SMEM prefetch
    nv = jnp.asarray(nv_np)                           # (num_out_tiles,)   i32, SMEM prefetch

    # ---- Index maps (scalar-prefetch driven, data-dependent point-tile choice). ----
    def _vec_map(i, k, tbl, nvr):
        return (0, tbl[i * K + k])

    def _src_map(i, k, tbl, nvr):
        return (tbl[i * K + k], 0)

    def _out_map(i, k, tbl, nvr):
        return (i, 0)

    grid_spec = pltpu.PrefetchScalarGridSpec(
        num_scalar_prefetch=2,
        grid=(num_out_tiles, K),
        in_specs=[
            pl.BlockSpec((1, P), _vec_map),          # rows per point
            pl.BlockSpec((1, P), _vec_map),          # depth weight per point
            pl.BlockSpec((P, C_pad), _src_map),      # gathered feat per point (bf16)
        ],
        out_specs=pl.BlockSpec((R, C_pad), _out_map),
    )

    out2d = pl.pallas_call(
        _bev_pool_kernel,
        out_shape=jax.ShapeDtypeStruct((n_bev_pad, C_pad), jnp.float32),
        grid_spec=grid_spec,
        compiler_params=pltpu.CompilerParams(
            dimension_semantics=("parallel", "arbitrary")),
    )(tbl_flat, nv, rows_pad, w_pad, src_pad)

    bev = out2d[:n_bev, :C].reshape(B, Dz, Dy, Dx, C)
    # TODO(synk): consumers that accept channels-last BEV features should skip this
    # transpose (it re-reads/re-writes the full BEV tensor in HBM); kept here to
    # match the torch module's (B, C, Dz, Dy, Dx) output exactly.
    return jnp.transpose(bev, (0, 4, 1, 2, 3))


def bev_pool_v2_ref(depth, feat, ranks_depth, ranks_feat, ranks_bev,
                    bev_feat_shape, feat_dtype=jnp.float32):
    # Pure-JAX reference (scatter-add over points; equals the CUDA per-interval
    # assignment when each BEV cell appears in at most one interval).
    # feat_dtype=bf16 emulates the kernel's bf16 streaming (f32 accumulation).
    B, Dz, Dy, Dx, C = bev_feat_shape
    w = depth.reshape(-1)[ranks_depth].astype(feat_dtype).astype(jnp.float32)
    f = feat.reshape(-1, C).astype(feat_dtype).astype(jnp.float32)[ranks_feat]
    out = jnp.zeros((B * Dz * Dy * Dx, C), jnp.float32).at[ranks_bev].add(w[:, None] * f)
    return jnp.transpose(out.reshape(B, Dz, Dy, Dx, C), (0, 4, 1, 2, 3))


if __name__ == "__main__":
    # Small, deterministic problem (multiple row tiles and multiple point tiles).
    B, Ncam, D, H, W, C = 1, 2, 4, 16, 16, 64
    Dz, Dy, Dx = 2, 16, 16
    bev_feat_shape = (B, Dz, Dy, Dx, C)
    n_bev = B * Dz * Dy * Dx                     # 512 -> 4 row tiles of 128
    n_intervals = 400                            # lengths 1..5 cycling -> 1200 pts -> 2 point tiles @ P=1024

    key = jax.random.PRNGKey(0)
    k1, k2, k3, k4, k5 = jax.random.split(key, 5)

    depth = jax.random.uniform(k1, (B, Ncam, D, H, W), jnp.float32)
    feat = jax.random.normal(k2, (B, Ncam, H, W, C), jnp.float32)

    lengths_py = [(i % 5) + 1 for i in range(n_intervals)]
    n_points = sum(lengths_py)                   # 1200
    interval_lengths = jnp.array(lengths_py, jnp.int32)
    interval_starts = jnp.concatenate(
        [jnp.zeros((1,), jnp.int32),
         jnp.cumsum(interval_lengths)[:-1].astype(jnp.int32)])

    # Distinct, sorted BEV cells (one per interval) -> points of an interval share a cell.
    bev_cells = jnp.sort(jax.random.permutation(k3, n_bev)[:n_intervals]).astype(jnp.int32)
    ranks_bev = jnp.repeat(bev_cells, interval_lengths,
                           total_repeat_length=n_points).astype(jnp.int32)
    ranks_depth = jax.random.randint(k4, (n_points,), 0, B * Ncam * D * H * W).astype(jnp.int32)
    ranks_feat = jax.random.randint(k5, (n_points,), 0, B * Ncam * H * W).astype(jnp.int32)

    out = bev_pool_v2_pallas(depth, feat, ranks_depth, ranks_feat, ranks_bev,
                             bev_feat_shape, interval_starts, interval_lengths)
    out = jax.block_until_ready(out)
    assert out.shape == (B, C, Dz, Dy, Dx), out.shape

    # Compare against a reference that emulates the kernel's bf16 streaming
    # (products are exact in f32, accumulation f32 in both) -> tight tolerance.
    ref_bf16 = bev_pool_v2_ref(depth, feat, ranks_depth, ranks_feat, ranks_bev,
                               bev_feat_shape, feat_dtype=jnp.bfloat16)
    np.testing.assert_allclose(np.asarray(out), np.asarray(ref_bf16), rtol=1e-3, atol=1e-3)

    print("KERNEL_OK")
</pallas_src>

<mosaic_0001>
module attributes {stable_mosaic.version = 11 : i64} {
  func.func @_bev_pool_kernel(%arg0: i32, %arg1: i32, %arg2: memref<8xi32, #tpu.memory_space<smem>>, %arg3: memref<4xi32, #tpu.memory_space<smem>>, %arg4: memref<1x1024xi32, #tpu.memory_space<vmem>>, %arg5: memref<1x1024xf32, #tpu.memory_space<vmem>>, %arg6: memref<1024x128xbf16, #tpu.memory_space<vmem>>, %arg7: memref<128x128xf32, #tpu.memory_space<vmem>>) attributes {dimension_semantics = [#tpu.dimension_semantics<parallel>, #tpu.dimension_semantics<arbitrary>], iteration_bounds = array<i64: 4, 2>, scalar_prefetch = 2 : i64, scratch_operands = 0 : i64, tpu.core_type = #tpu.core_type<tc>, window_params = [{transform_indices = @transform_0, window_bounds = array<i64: 1, 1024>}, {transform_indices = @transform_1, window_bounds = array<i64: 1, 1024>}, {transform_indices = @transform_2, window_bounds = array<i64: 1024, 128>}, {transform_indices = @transform_3, window_bounds = array<i64: 128, 128>}]} {
    %c0_i32 = arith.constant 0 : i32
    %0 = arith.cmpi eq, %arg1, %c0_i32 : i32
    %1 = arith.extui %0 : i1 to i32
    %c0_i32_0 = arith.constant 0 : i32
    %2 = arith.cmpi ne, %1, %c0_i32_0 : i32
    scf.if %2 {
      %cst = arith.constant 0.000000e+00 : f32
      %8 = vector.broadcast %cst : f32 to vector<128x128xf32>
      %c0 = arith.constant 0 : index
      %c0_2 = arith.constant 0 : index
      %9 = vector.load %arg7[%c0, %c0_2] : memref<128x128xf32, #tpu.memory_space<vmem>>, vector<128x128xf32>
      tpu.vector_store %arg7[%c0, %c0_2], %8 {strides = array<i32>} : memref<128x128xf32, #tpu.memory_space<vmem>>, vector<128x128xf32>,
    } else {
    }
    %3 = arith.index_cast %arg0 : i32 to index
    %4 = memref.load %arg3[%3] : memref<4xi32, #tpu.memory_space<smem>>
    %5 = arith.cmpi slt, %arg1, %4 : i32
    %6 = arith.extui %5 : i1 to i32
    %c0_i32_1 = arith.constant 0 : i32
    %7 = arith.cmpi ne, %6, %c0_i32_1 : i32
    scf.if %7 {
      %c0 = arith.constant 0 : index
      %c0_2 = arith.constant 0 : index
      %8 = vector.load %arg4[%c0, %c0_2] : memref<1x1024xi32, #tpu.memory_space<vmem>>, vector<1x1024xi32>
      %c0_3 = arith.constant 0 : index
      %c0_4 = arith.constant 0 : index
      %9 = vector.load %arg5[%c0_3, %c0_4] : memref<1x1024xf32, #tpu.memory_space<vmem>>, vector<1x1024xf32>
      %c128_i32 = arith.constant 128 : i32
      %10 = arith.muli %arg0, %c128_i32 : i32
      %11 = vector.broadcast %10 : i32 to vector<1x1024xi32>
      %12 = arith.subi %8, %11 : vector<1x1024xi32>
      %13 = tpu.iota {dimensions = array<i32: 0>} : vector<128x1xi32>
      %14 = vector.broadcast %12 : vector<1x1024xi32> to vector<128x1024xi32>
      %15 = vector.broadcast %13 : vector<128x1xi32> to vector<128x1024xi32>
      %16 = arith.cmpi eq, %14, %15 : vector<128x1024xi32>
      %cst = arith.constant 0.000000e+00 : f32
      %17 = vector.shape_cast %9 : vector<1x1024xf32> to vector<1x1024xf32>
      %18 = vector.broadcast %17 : vector<1x1024xf32> to vector<128x1024xf32>
      %19 = vector.broadcast %cst : f32 to vector<128x1024xf32>
      %20 = arith.select %16, %18, %19 : vector<128x1024xi1>, vector<128x1024xf32>
      %c0_5 = arith.constant 0 : index
      %c0_6 = arith.constant 0 : index
      %21 = vector.load %arg7[%c0_5, %c0_6] : memref<128x128xf32, #tpu.memory_space<vmem>>, vector<128x128xf32>
      %22 = arith.truncf %20 : vector<128x1024xf32> to vector<128x1024xbf16>
      %c0_7 = arith.constant 0 : index
      %c0_8 = arith.constant 0 : index
      %23 = vector.load %arg6[%c0_7, %c0_8] : memref<1024x128xbf16, #tpu.memory_space<vmem>>, vector<1024x128xbf16>
      %cst_9 = arith.constant dense<0.000000e+00> : vector<128x128xf32>
      %24 = tpu.matmul %22, %23, %cst_9 {dimension_numbers = #tpu.dot_dimension_numbers<[1], [0], [0], [1], [0, 0, 1, 1], [], []>} : vector<128x1024xbf16>, vector<1024x128xbf16>, vector<128x128xf32> -> vector<128x128xf32>
      %25 = arith.addf %21, %24 : vector<128x128xf32>
      %c0_10 = arith.constant 0 : index
      %c0_11 = arith.constant 0 : index
      %26 = vector.load %arg7[%c0_10, %c0_11] : memref<128x128xf32, #tpu.memory_space<vmem>>, vector<128x128xf32>
      tpu.vector_store %arg7[%c0_10, %c0_11], %25 {strides = array<i32>} : memref<128x128xf32, #tpu.memory_space<vmem>>, vector<128x128xf32>,
    } else {
    }
    return
  }
  func.func @transform_0(%arg0: i32, %arg1: i32, %arg2: memref<8xi32, #tpu.memory_space<smem>>, %arg3: memref<4xi32, #tpu.memory_space<smem>>) -> (i32, i32) {
    %c2_i32 = arith.constant 2 : i32
    %0 = arith.muli %arg0, %c2_i32 : i32
    %1 = arith.addi %0, %arg1 : i32
    %2 = arith.index_cast %1 : i32 to index
    %3 = memref.load %arg2[%2] : memref<8xi32, #tpu.memory_space<smem>>
    %c0_i32 = arith.constant 0 : i32
    %c0_i32_0 = arith.constant 0 : i32
    return %c0_i32, %3 : i32, i32
  }
  func.func @transform_1(%arg0: i32, %arg1: i32, %arg2: memref<8xi32, #tpu.memory_space<smem>>, %arg3: memref<4xi32, #tpu.memory_space<smem>>) -> (i32, i32) {
    %c2_i32 = arith.constant 2 : i32
    %0 = arith.muli %arg0, %c2_i32 : i32
    %1 = arith.addi %0, %arg1 : i32
    %2 = arith.index_cast %1 : i32 to index
    %3 = memref.load %arg2[%2] : memref<8xi32, #tpu.memory_space<smem>>
    %c0_i32 = arith.constant 0 : i32
    %c0_i32_0 = arith.constant 0 : i32
    return %c0_i32, %3 : i32, i32
  }
  func.func @transform_2(%arg0: i32, %arg1: i32, %arg2: memref<8xi32, #tpu.memory_space<smem>>, %arg3: memref<4xi32, #tpu.memory_space<smem>>) -> (i32, i32) {
    %c2_i32 = arith.constant 2 : i32
    %0 = arith.muli %arg0, %c2_i32 : i32
    %1 = arith.addi %0, %arg1 : i32
    %2 = arith.index_cast %1 : i32 to index
    %3 = memref.load %arg2[%2] : memref<8xi32, #tpu.memory_space<smem>>
    %c0_i32 = arith.constant 0 : i32
    %c0_i32_0 = arith.constant 0 : i32
    return %3, %c0_i32 : i32, i32
  }
  func.func @transform_3(%arg0: i32, %arg1: i32, %arg2: memref<8xi32, #tpu.memory_space<smem>>, %arg3: memref<4xi32, #tpu.memory_space<smem>>) -> (i32, i32) {
    %c0_i32 = arith.constant 0 : i32
    %c0_i32_0 = arith.constant 0 : i32
    return %arg0, %c0_i32 : i32, i32
  }
}

</mosaic_0001>

<llo_original>
// kernel: tpu_custom_call.1
$region0: #{tpu_custom_call.1}
  #allocation0 [shape = 'u32[]', space=smem, size = 0x4, offset = 0x4, fixed_abs, tag = 'smem constant byte address 0x4 - core index']
  #allocation1 [shape = 'u32[144,128]{1,0:T(1,128)}', space=vmem, size = 0x12000, scoped, tag = 'internal scratch']
  #allocation2 [shape = 's32[1]{0}', space=sflag, size = 0x4, scoped, tag = 'scoped memory for tpu_custom_call.1']
  #allocation3 [shape = 'u8[512]{0}', space=smem, size = 0x200, scoped, tag = 'prefetched SMEM operand 0']
  #allocation4 [shape = 'u8[512]{0}', space=smem, size = 0x200, scoped, tag = 'prefetched SMEM operand 1']
  %s0 = inlined_call_operand.hbm [shape: s32[8], index: 0, kind: input, shape index: {}]
  %s1 = inlined_call_operand.vmem [shape: s32[4], index: 1, kind: input, shape index: {}]
  %s2 = inlined_call_operand.hbm [shape: s32[1,2048], index: 2, kind: input, shape index: {}]
  %s3 = inlined_call_operand.hbm [shape: f32[1,2048], index: 3, kind: input, shape index: {}]
  %s4 = inlined_call_operand.hbm [shape: bf16[2048,128], index: 4, kind: input, shape index: {}]
  %s5 = inlined_call_operand.hbm [shape: f32[512,128], index: 5, kind: output, shape index: {}]
  %s6 = sld [smem:[#allocation0]]
  $region65: #{tpu_custom_call.1} parent=0
    _
  %s8 = ssub.s32 1, %s6
  %s9 = scalar_select 0, %s8, %s6
  %11 = dma.hbm_to_smem %s0, 16, [#allocation3], [#allocation2]
  %s12 = sshll.u32 %s1, 4
  %s13 = int_to_ptr.vmem [resolvable:$true] %s12
  %15 = dma.vmem_to_smem %s13, 16, [#allocation4], [#allocation2]
  %16 = dma.done [#allocation2], 32
  %17 = sfence
  $region1: #{tpu_custom_call.1} parent=0
    #allocation5 [shape = 'u8[8192]{0}', space=vmem, size = 0x2000, scoped, tag = 'input window, operand 2']
    #allocation6 [shape = 's32[2]{0}', space=sflag, size = 0x8, scoped, tag = 'scoped memory for tpu_custom_call.1']
    #allocation7 [shape = 's32[2]{0}', space=sflag, size = 0x8, scoped, tag = 'scoped memory for tpu_custom_call.1']
    #allocation8 [shape = 'u8[8192]{0}', space=vmem, size = 0x2000, scoped, tag = 'input window, operand 3']
    #allocation9 [shape = 's32[2]{0}', space=sflag, size = 0x8, scoped, tag = 'scoped memory for tpu_custom_call.1']
    #allocation10 [shape = 'u8[524288]{0}', space=vmem, size = 0x80000, scoped, tag = 'input window, operand 4']
    #allocation11 [shape = 'u8[131072]{0}', space=vmem, size = 0x20000, scoped, tag = 'output window, operand 0']
    %18 = vsyncpa [#allocation6], 0
    %s19 = scalar_lea.sflag [#allocation6], 1
    %20 = vsyncpa %s19, 0
    %21 = vsyncpa [#allocation9], 0
    %s22 = scalar_lea.sflag [#allocation9], 1
    %23 = vsyncpa %s22, 0
    %24 = vsyncpa [#allocation7], 0
    %s25 = scalar_lea.sflag [#allocation7], 1
    %26 = vsyncpa %s25, 0
    loop: start=0, step=1, limit=10
    $region2: #{tpu_custom_call.1} parent=1 // loop_pre_header
      _
    $region3: #{tpu_custom_call.1} parent=1 // loop_header
      %s28 = sphi 0, %s32
      %p29 = scmp.ge.s32.totalorder %s28, 10
      %s35 = sphi 0, %s47
      %s36 = sphi 0, %s43
      %s37 = sphi 0, %s35
      %s38 = sphi 0, %s36
      %s39 = sphi 0, %s37
      %s40 = sphi 0, %s38
      %s56 = sphi 0, %s58
      %s59 = sphi 0, %s56
      %s60 = sphi 0, %s59
      %s76 = sphi 0, %s60
      %s88 = sphi 0, %s90
      %s91 = sphi 0, %s88
      %s92 = sphi 0, %s91
      %s108 = sphi 0, %s92
      %s120 = sphi 0, %s122
      %s123 = sphi 0, %s120
      %s124 = sphi 0, %s123
      %s140 = sphi 0, %s124
      %s146 = sphi 0, %s148
      %s149 = sphi 0, %s146
      %s150 = sphi 0, %s149
      %s166 = sphi 0, %s150
    $region4: #{tpu_custom_call.1} parent=1 // loop_header_branch
      %31 = sbr.rel (%p29) target = $region8
    $region5: #{tpu_custom_call.1} parent=1 // loop_body
      %s33 = ssub.s32 %s28, 1
      %s34 = ssub.s32 %s28, 2
      %s41 = sadd.s32 1, %s36
      %p42 = scmp.ge.s32.totalorder %s41, 2
      %s43 = scalar_select %p42, 0, %s41
      %s44 = sadd.s32 1, %s35
      %s45 = scalar_select %p42, %s44, %s35
      %p46 = scmp.ge.s32.totalorder %s45, 4
      %s47 = scalar_select %p46, 0, %s45
      %s48 = smul.u32 %s35, 2
      %s49 = sadd.s32 %s48, %s36
      %s50 = sld [smem:[#allocation3 + %s49]]
      %s51 = smul.u32 %s47, 2
      %s52 = sadd.s32 %s51, %s43
      %s53 = sld [smem:[#allocation3 + %s52]]
      %s54 = ssub.s32 %s50, %s53
      %p55 = scmp.eq.s32.totalorder %s54, 0
      %s57 = sadd.s32 %s56, 1
      %s58 = scalar_select %p55, %s56, %s57
      %p61 = pneg %p55
      %p62 = scmp.eq.s32.totalorder %s28, 7
      %p63 = por %p61, %p62
      %p64 = scmp.ne.s32.totalorder %s56, %s59
      %p65 = scmp.eq.s32.totalorder %s28, 0
      %p66 = por %p64, %p65
      %p67 = scmp.ne.s32.totalorder %s56, %s59
      %p68 = scmp.eq.s32.totalorder %s33, 7
      %p69 = por %p67, %p68
      %p70 = scmp.ne.s32.totalorder %s59, %s60
      %p71 = scmp.eq.s32.totalorder %s33, 0
      %p72 = por %p70, %p71
      %p73 = scmp.ne.s32.totalorder %s59, %s60
      %p74 = scmp.eq.s32.totalorder %s34, 7
      %p75 = por %p73, %p74
      %p77 = scmp.ne.s32.totalorder %s60, %s76
      %p78 = scmp.eq.s32.totalorder %s34, 0
      %p79 = por %p77, %p78
      %s80 = smul.u32 %s35, 2
      %s81 = sadd.s32 %s80, %s36
      %s82 = sld [smem:[#allocation3 + %s81]]
      %s83 = smul.u32 %s47, 2
      %s84 = sadd.s32 %s83, %s43
      %s85 = sld [smem:[#allocation3 + %s84]]
      %s86 = ssub.s32 %s82, %s85
      %p87 = scmp.eq.s32.totalorder %s86, 0
      %s89 = sadd.s32 %s88, 1
      %s90 = scalar_select %p87, %s88, %s89
      %p93 = pneg %p87
      %p94 = scmp.eq.s32.totalorder %s28, 7
      %p95 = por %p93, %p94
      %p96 = scmp.ne.s32.totalorder %s88, %s91
      %p97 = scmp.eq.s32.totalorder %s28, 0
      %p98 = por %p96, %p97
      %p99 = scmp.ne.s32.totalorder %s88, %s91
      %p100 = scmp.eq.s32.totalorder %s33, 7
      %p101 = por %p99, %p100
      %p102 = scmp.ne.s32.totalorder %s91, %s92
      %p103 = scmp.eq.s32.totalorder %s33, 0
      %p104 = por %p102, %p103
      %p105 = scmp.ne.s32.totalorder %s91, %s92
      %p106 = scmp.eq.s32.totalorder %s34, 7
      %p107 = por %p105, %p106
      %p109 = scmp.ne.s32.totalorder %s92, %s108
      %p110 = scmp.eq.s32.totalorder %s34, 0
      %p111 = por %p109, %p110
      %s112 = smul.u32 %s35, 2
      %s113 = sadd.s32 %s112, %s36
      %s114 = sld [smem:[#allocation3 + %s113]]
      %s115 = smul.u32 %s47, 2
      %s116 = sadd.s32 %s115, %s43
      %s117 = sld [smem:[#allocation3 + %s116]]
      %s118 = ssub.s32 %s114, %s117
      %p119 = scmp.eq.s32.totalorder %s118, 0
      %s121 = sadd.s32 %s120, 1
      %s122 = scalar_select %p119, %s120, %s121
      %p125 = pneg %p119
      %p126 = scmp.eq.s32.totalorder %s28, 7
      %p127 = por %p125, %p126
      %p128 = scmp.ne.s32.totalorder %s120, %s123
      %p129 = scmp.eq.s32.totalorder %s28, 0
      %p130 = por %p128, %p129
      %p131 = scmp.ne.s32.totalorder %s120, %s123
      %p132 = scmp.eq.s32.totalorder %s33, 7
      %p133 = por %p131, %p132
      %p134 = scmp.ne.s32.totalorder %s123, %s124
      %p135 = scmp.eq.s32.totalorder %s33, 0
      %p136 = por %p134, %p135
      %p137 = scmp.ne.s32.totalorder %s123, %s124
      %p138 = scmp.eq.s32.totalorder %s34, 7
      %p139 = por %p137, %p138
      %p141 = scmp.ne.s32.totalorder %s124, %s140
      %p142 = scmp.eq.s32.totalorder %s34, 0
      %p143 = por %p141, %p142
      %s144 = ssub.s32 %s35, %s47
      %p145 = scmp.eq.s32.totalorder %s144, 0
      %s147 = sadd.s32 %s146, 1
      %s148 = scalar_select %p145, %s146, %s147
      %p151 = pneg %p145
      %p152 = scmp.eq.s32.totalorder %s28, 7
      %p153 = por %p151, %p152
      %p154 = scmp.ne.s32.totalorder %s146, %s149
      %p155 = scmp.eq.s32.totalorder %s28, 0
      %p156 = por %p154, %p155
      %p157 = scmp.ne.s32.totalorder %s146, %s149
      %p158 = scmp.eq.s32.totalorder %s33, 7
      %p159 = por %p157, %p158
      %p160 = scmp.ne.s32.totalorder %s149, %s150
      %p161 = scmp.eq.s32.totalorder %s33, 0
      %p162 = por %p160, %p161
      %p163 = scmp.ne.s32.totalorder %s149, %s150
      %p164 = scmp.eq.s32.totalorder %s34, 7
      %p165 = por %p163, %p164
      %p167 = scmp.ne.s32.totalorder %s150, %s166
      %p168 = scmp.eq.s32.totalorder %s34, 0
      %p169 = por %p167, %p168
      %p170 = scmp.le.s32.totalorder 1, %s28
      %p171 = scmp.lt.s32.totalorder %s28, 9
      %p172 = pnand %p170, %p171
      %p173 = pneg %p172
      // Predicated region
      $region9: #{tpu_custom_call.1} parent=5 // pred_check
        _
      $region10: #{tpu_custom_call.1} parent=5 // pred_check_branch
        %175 = sbr.rel (%p172) target = $region12
      $region11: #{tpu_custom_call.1} parent=5 // pred_region
        %s176 = ssub.s32 %s28, 1
      $region12: #{tpu_custom_call.1} parent=5 // pred_fallthru
        _
      %p177 = scmp.lt.s32.totalorder %s28, 8
      // Predicated region
      $region13: #{tpu_custom_call.1} parent=5 // pred_check
        %p178 = pneg %p177
      $region14: #{tpu_custom_call.1} parent=5 // pred_check_branch
        %180 = sbr.rel (%p178) target = $region16
      $region15: #{tpu_custom_call.1} parent=5 // pred_region
        // Predicated region
        $region17: #{tpu_custom_call.1} parent=15 // pred_check
          %p181 = pneg %p66
        $region18: #{tpu_custom_call.1} parent=15 // pred_check_branch
          %183 = sbr.rel (%p181) target = $region20
        $region19: #{tpu_custom_call.1} parent=15 // pred_region
          %s184 = sand.u32 %s56, 1
          %s185 = scalar_lea.sflag [#allocation6], %s184
          %s186 = sand.u32 %s56, 1
          %s187 = smul.addr %s186, 8
          %s188 = scalar_lea.vmem [#allocation5], %s187
          %s189 = smul.u32 %s35, 2
          %s190 = sadd.s32 %s189, %s36
          %s191 = sld [smem:[#allocation3 + %s190]]
          %s192 = smul.u32 8, %s191
          %s194 = ssub.s32 128, 128
          %195 = vsyncadd %s185, %s194
          %s196 = smul.addr %s192, 16
          %s197 = scalar_lea.hbm %s2, %s196
          %s199 = sshll.u32 %s188, 4
          %s200 = int_to_ptr.vmem [resolvable:$true] %s199
          %202 = dma.hbm_to_vmem [thread:$0]  %s197, 128, %s200, %s185
        $region20: #{tpu_custom_call.1} parent=15 // pred_fallthru
          _
        // Predicated region
        $region21: #{tpu_custom_call.1} parent=15 // pred_check
          %p203 = pneg %p98
        $region22: #{tpu_custom_call.1} parent=15 // pred_check_branch
          %205 = sbr.rel (%p203) target = $region24
        $region23: #{tpu_custom_call.1} parent=15 // pred_region
          %s206 = sand.u32 %s28, 1
          %s207 = scalar_lea.sflag [#allocation9], %s206
          %s208 = sand.u32 %s88, 1
          %s209 = smul.addr %s208, 8
          %s210 = scalar_lea.vmem [#allocation8], %s209
          %s211 = smul.u32 %s35, 2
          %s212 = sadd.s32 %s211, %s36
          %s213 = sld [smem:[#allocation3 + %s212]]
          %s214 = smul.u32 8, %s213
          %s216 = ssub.s32 128, 128
          %217 = vsyncadd %s207, %s216
          %s218 = smul.addr %s214, 16
          %s219 = scalar_lea.hbm %s3, %s218
          %s221 = sshll.u32 %s210, 4
          %s222 = int_to_ptr.vmem [resolvable:$true] %s221
          %224 = dma.hbm_to_vmem [thread:$0]  %s219, 128, %s222, %s207
        $region24: #{tpu_custom_call.1} parent=15 // pred_fallthru
          _
        // Predicated region
        $region25: #{tpu_custom_call.1} parent=15 // pred_check
          %p225 = pneg %p130
        $region26: #{tpu_custom_call.1} parent=15 // pred_check_branch
          %227 = sbr.rel (%p225) target = $region28
        $region27: #{tpu_custom_call.1} parent=15 // pred_region
          %s228 = sand.u32 %s28, 1
          %s229 = scalar_lea.sflag [#allocation9], %s228
          %s230 = sand.u32 %s120, 1
          %s231 = smul.addr %s230, 512
          %s232 = scalar_lea.vmem [#allocation10], %s231
          %s233 = smul.u32 %s35, 2
          %s234 = sadd.s32 %s233, %s36
          %s235 = sld [smem:[#allocation3 + %s234]]
          %s236 = smul.u32 128, %s235
          %s238 = ssub.s32 8192, 8192
          %239 = vsyncadd %s229, %s238
          %s240 = smul.addr %s236, 64
          %s241 = scalar_lea.hbm %s4, %s240
          %s242 = sshll.u32 %s232, 4
          %s243 = int_to_ptr.vmem [resolvable:$true] %s242
          %248 = dma.hbm_to_vmem [thread:$0]  %s241, 8192, %s243, %s229, 64, 64, 4
        $region28: #{tpu_custom_call.1} parent=15 // pred_fallthru
          _
      $region16: #{tpu_custom_call.1} parent=5 // pred_fallthru
        _
      %p249 = scmp.le.s32.totalorder 1, %s28
      %p250 = scmp.lt.s32.totalorder %s28, 9
      %p251 = pnand %p249, %p250
      %p252 = pneg %p251
      // Predicated region
      $region29: #{tpu_custom_call.1} parent=5 // pred_check
        _
      $region30: #{tpu_custom_call.1} parent=5 // pred_check_branch
        %254 = sbr.rel (%p251) target = $region32
      $region31: #{tpu_custom_call.1} parent=5 // pred_region
        %s255 = ssub.s32 %s28, 1
        %s256 = sand.u32 %s59, 1
        %s257 = scalar_lea.sflag [#allocation6], %s256
        %s258 = sand.u32 %s59, 1
        %s259 = smul.addr %s258, 8
        %s260 = scalar_lea.vmem [#allocation5], %s259
        // Predicated region
        $region33: #{tpu_custom_call.1} parent=31 // pred_check
          %p261 = pneg %p72
        $region34: #{tpu_custom_call.1} parent=31 // pred_check_branch
          %263 = sbr.rel (%p261) target = $region36
        $region35: #{tpu_custom_call.1} parent=31 // pred_region
          %264 = dma.done %s257, 128
        $region36: #{tpu_custom_call.1} parent=31 // pred_fallthru
          _
        %s265 = sand.u32 %s33, 1
        %s266 = scalar_lea.sflag [#allocation9], %s265
        %s267 = sand.u32 %s91, 1
        %s268 = smul.addr %s267, 8
        %s269 = scalar_lea.vmem [#allocation8], %s268
        // Predicated region
        $region37: #{tpu_custom_call.1} parent=31 // pred_check
          %p270 = pneg %p104
        $region38: #{tpu_custom_call.1} parent=31 // pred_check_branch
          %272 = sbr.rel (%p270) target = $region40
        $region39: #{tpu_custom_call.1} parent=31 // pred_region
          %273 = dma.done %s266, 128
        $region40: #{tpu_custom_call.1} parent=31 // pred_fallthru
          _
        %s274 = sand.u32 %s33, 1
        %s275 = scalar_lea.sflag [#allocation9], %s274
        %s276 = sand.u32 %s123, 1
        %s277 = smul.addr %s276, 512
        %s278 = scalar_lea.vmem [#allocation10], %s277
        // Predicated region
        $region41: #{tpu_custom_call.1} parent=31 // pred_check
          %p279 = pneg %p136
        $region42: #{tpu_custom_call.1} parent=31 // pred_check_branch
          %281 = sbr.rel (%p279) target = $region44
        $region43: #{tpu_custom_call.1} parent=31 // pred_region
          %282 = dma.done %s275, 8192
        $region44: #{tpu_custom_call.1} parent=31 // pred_fallthru
          _
        %s283 = sand.u32 %s59, 1
        %s284 = scalar_lea.sflag [#allocation6], %s283
        %s285 = sand.u32 %s59, 1
        %s286 = smul.addr %s285, 8
        %s287 = scalar_lea.vmem [#allocation5], %s286
        %p288 = pneg %p72
        %p289 = pneg %p69
        %s290 = sand.u32 %s33, 1
        %s291 = scalar_lea.sflag [#allocation9], %s290
        %s292 = sand.u32 %s91, 1
        %s293 = smul.addr %s292, 8
        %s294 = scalar_lea.vmem [#allocation8], %s293
        %p295 = pneg %p104
        %p296 = pneg %p101
        %s297 = sand.u32 %s33, 1
        %s298 = scalar_lea.sflag [#allocation9], %s297
        %s299 = sand.u32 %s123, 1
        %s300 = smul.addr %s299, 512
        %s301 = scalar_lea.vmem [#allocation10], %s300
        %p302 = pneg %p136
        %p303 = pneg %p133
        %p304 = pneg %p162
        %p305 = pneg %p159
        %s306 = sand.u32 %s149, 1
        %s307 = scalar_lea.sflag [#allocation7], %s306
        %s308 = sand.u32 %s149, 1
        %s309 = smul.addr %s308, 128
        %s310 = scalar_lea.vmem [#allocation11], %s309
        %s311 = smul.u32 %s37, 2
        %s312 = sadd.s32 %s311, %s38
        %s313 = sld [smem:[#allocation3 + %s312]]
        %s314 = smul.u32 8, %s313
        %s315 = smul.u32 %s37, 2
        %s316 = sadd.s32 %s315, %s38
        %s317 = sld [smem:[#allocation3 + %s316]]
        %s318 = smul.u32 8, %s317
        %s319 = smul.u32 %s37, 2
        %s320 = sadd.s32 %s319, %s38
        %s321 = sld [smem:[#allocation3 + %s320]]
        %s322 = smul.u32 128, %s321
        %s323 = smul.u32 16, %s37
        %p325 = scmp.eq.s32.totalorder %s38, 0
        // Predicated region
        $region45: #{tpu_custom_call.1} parent=31 // pred_check
          %p326 = pneg %p325
        $region46: #{tpu_custom_call.1} parent=31 // pred_check_branch
          %328 = sbr.rel (%p326) target = $region48
        $region47: #{tpu_custom_call.1} parent=31 // pred_region
          %329 = vst [vmem:[%s310] sm:$0xff] 0.0
          %330 = vst [vmem:[%s310 + $0x8] sm:$0xff] 0.0
          %331 = vst [vmem:[%s310 + $0x10] sm:$0xff] 0.0
          %332 = vst [vmem:[%s310 + $0x18] sm:$0xff] 0.0
          %333 = vst [vmem:[%s310 + $0x20] sm:$0xff] 0.0
          %334 = vst [vmem:[%s310 + $0x28] sm:$0xff] 0.0
          %335 = vst [vmem:[%s310 + $0x30] sm:$0xff] 0.0
          %336 = vst [vmem:[%s310 + $0x38] sm:$0xff] 0.0
          %337 = vst [vmem:[%s310 + $0x40] sm:$0xff] 0.0
          %338 = vst [vmem:[%s310 + $0x48] sm:$0xff] 0.0
          %339 = vst [vmem:[%s310 + $0x50] sm:$0xff] 0.0
          %340 = vst [vmem:[%s310 + $0x58] sm:$0xff] 0.0
          %341 = vst [vmem:[%s310 + $0x60] sm:$0xff] 0.0
          %342 = vst [vmem:[%s310 + $0x68] sm:$0xff] 0.0
          %343 = vst [vmem:[%s310 + $0x70] sm:$0xff] 0.0
          %344 = vst [vmem:[%s310 + $0x78] sm:$0xff] 0.0
        $region48: #{tpu_custom_call.1} parent=31 // pred_fallthru
          _
        %s345 = sld [smem:[#allocation4 + %s37]]
        %p346 = scmp.lt.s32.totalorder %s38, %s345
        // Predicated region
        $region49: #{tpu_custom_call.1} parent=31 // pred_check
          %p347 = pneg %p346
        $region50: #{tpu_custom_call.1} parent=31 // pred_check_branch
          %349 = sbr.rel (%p347) target = $region52
        $region51: #{tpu_custom_call.1} parent=31 // pred_region
          %v350 = vld [vmem:[%s260] sm:$0xff]
          %v351 = vld [vmem:[%s269] sm:$0xff]
          %s352 = smul.u32 %s37, 128
          %v353 = vstv %s352
          %v354 = vsub.s32 %v350, %v353
          %v355 = vlaneseq
          %v356 = vshrl.u32 %v355, 7
          %v357 = vadd.s32 %v356, 8
          %v358 = vadd.s32 %v356, 16
          %v359 = vadd.s32 %v356, 24
          %v360 = vadd.s32 %v356, 32
          %v361 = vadd.s32 %v356, 40
          %v362 = vadd.s32 %v356, 48
          %v363 = vadd.s32 %v356, 56
          %v364 = vadd.s32 %v356, 64
          %v365 = vadd.s32 %v356, 72
          %v366 = vadd.s32 %v356, 80
          %v367 = vadd.s32 %v356, 88
          %v368 = vadd.s32 %v356, 96
          %v369 = vadd.s32 %v356, 104
          %v370 = vadd.s32 %v356, 112
          %v371 = vadd.s32 %v356, 120
          %v372 = vlaneseq
          %v373 = vshrl.u32 %v372, 7
          %v374 = vsub.s32 0, %v373
          %v375 = vrot.slane %v354, %v374
          %v376 = vlaneseq
          %v377 = vshrl.u32 %v376, 7
          %v378 = vsub.s32 1, %v377
          %v379 = vrot.slane %v354, %v378
          %v380 = vlaneseq
          %v381 = vshrl.u32 %v380, 7
          %v382 = vsub.s32 2, %v381
          %v383 = vrot.slane %v354, %v382
          %v384 = vlaneseq
          %v385 = vshrl.u32 %v384, 7
          %v386 = vsub.s32 3, %v385
          %v387 = vrot.slane %v354, %v386
          %v388 = vlaneseq
          %v389 = vshrl.u32 %v388, 7
          %v390 = vsub.s32 4, %v389
          %v391 = vrot.slane %v354, %v390
          %v392 = vlaneseq
          %v393 = vshrl.u32 %v392, 7
          %v394 = vsub.s32 5, %v393
          %v395 = vrot.slane %v354, %v394
          %v396 = vlaneseq
          %v397 = vshrl.u32 %v396, 7
          %v398 = vsub.s32 6, %v397
          %v399 = vrot.slane %v354, %v398
          %v400 = vlaneseq
          %v401 = vshrl.u32 %v400, 7
          %v402 = vsub.s32 7, %v401
          %v403 = vrot.slane %v354, %v402
          %vm404 = vcmp.eq.s32.totalorder %v375, %v356
          %vm405 = vcmp.eq.s32.totalorder %v379, %v356
          %vm406 = vcmp.eq.s32.totalorder %v383, %v356
          %vm407 = vcmp.eq.s32.totalorder %v387, %v356
          %vm408 = vcmp.eq.s32.totalorder %v391, %v356
          %vm409 = vcmp.eq.s32.totalorder %v395, %v356
          %vm410 = vcmp.eq.s32.totalorder %v399, %v356
          %vm411 = vcmp.eq.s32.totalorder %v403, %v356
          %vm412 = vcmp.eq.s32.totalorder %v375, %v357
          %vm413 = vcmp.eq.s32.totalorder %v379, %v357
          %vm414 = vcmp.eq.s32.totalorder %v383, %v357
          %vm415 = vcmp.eq.s32.totalorder %v387, %v357
          %vm416 = vcmp.eq.s32.totalorder %v391, %v357
          %vm417 = vcmp.eq.s32.totalorder %v395, %v357
          %vm418 = vcmp.eq.s32.totalorder %v399, %v357
          %vm419 = vcmp.eq.s32.totalorder %v403, %v357
          %vm420 = vcmp.eq.s32.totalorder %v375, %v358
          %vm421 = vcmp.eq.s32.totalorder %v379, %v358
          %vm422 = vcmp.eq.s32.totalorder %v383, %v358
          %vm423 = vcmp.eq.s32.totalorder %v387, %v358
          %vm424 = vcmp.eq.s32.totalorder %v391, %v358
          %vm425 = vcmp.eq.s32.totalorder %v395, %v358
          %vm426 = vcmp.eq.s32.totalorder %v399, %v358
          %vm427 = vcmp.eq.s32.totalorder %v403, %v358
          %vm428 = vcmp.eq.s32.totalorder %v375, %v359
          %vm429 = vcmp.eq.s32.totalorder %v379, %v359
          %vm430 = vcmp.eq.s32.totalorder %v383, %v359
          %vm431 = vcmp.eq.s32.totalorder %v387, %v359
          %vm432 = vcmp.eq.s32.totalorder %v391, %v359
          %vm433 = vcmp.eq.s32.totalorder %v395, %v359
          %vm434 = vcmp.eq.s32.totalorder %v399, %v359
          %vm435 = vcmp.eq.s32.totalorder %v403, %v359
          %vm436 = vcmp.eq.s32.totalorder %v375, %v360
          %vm437 = vcmp.eq.s32.totalorder %v379, %v360
          %vm438 = vcmp.eq.s32.totalorder %v383, %v360
          %vm439 = vcmp.eq.s32.totalorder %v387, %v360
          %vm440 = vcmp.eq.s32.totalorder %v391, %v360
          %vm441 = vcmp.eq.s32.totalorder %v395, %v360
          %vm442 = vcmp.eq.s32.totalorder %v399, %v360
          %vm443 = vcmp.eq.s32.totalorder %v403, %v360
          %vm444 = vcmp.eq.s32.totalorder %v375, %v361
          %vm445 = vcmp.eq.s32.totalorder %v379, %v361
          %vm446 = vcmp.eq.s32.totalorder %v383, %v361
          %vm447 = vcmp.eq.s32.totalorder %v387, %v361
          %vm448 = vcmp.eq.s32.totalorder %v391, %v361
          %vm449 = vcmp.eq.s32.totalorder %v395, %v361
          %vm450 = vcmp.eq.s32.totalorder %v399, %v361
          %vm451 = vcmp.eq.s32.totalorder %v403, %v361
          %vm452 = vcmp.eq.s32.totalorder %v375, %v362
          %vm453 = vcmp.eq.s32.totalorder %v379, %v362
          %vm454 = vcmp.eq.s32.totalorder %v383, %v362
          %vm455 = vcmp.eq.s32.totalorder %v387, %v362
          %vm456 = vcmp.eq.s32.totalorder %v391, %v362
          %vm457 = vcmp.eq.s32.totalorder %v395, %v362
          %vm458 = vcmp.eq.s32.totalorder %v399, %v362
          %vm459 = vcmp.eq.s32.totalorder %v403, %v362
          %vm460 = vcmp.eq.s32.totalorder %v375, %v363
          %vm461 = vcmp.eq.s32.totalorder %v379, %v363
          %vm462 = vcmp.eq.s32.totalorder %v383, %v363
          %vm463 = vcmp.eq.s32.totalorder %v387, %v363
          %vm464 = vcmp.eq.s32.totalorder %v391, %v363
          %vm465 = vcmp.eq.s32.totalorder %v395, %v363
          %vm466 = vcmp.eq.s32.totalorder %v399, %v363
          %vm467 = vcmp.eq.s32.totalorder %v403, %v363
          %vm468 = vcmp.eq.s32.totalorder %v375, %v364
          %vm469 = vcmp.eq.s32.totalorder %v379, %v364
          %vm470 = vcmp.eq.s32.totalorder %v383, %v364
          %vm471 = vcmp.eq.s32.totalorder %v387, %v364
          %vm472 = vcmp.eq.s32.totalorder %v391, %v364
          %vm473 = vcmp.eq.s32.totalorder %v395, %v364
          %vm474 = vcmp.eq.s32.totalorder %v399, %v364
          %vm475 = vcmp.eq.s32.totalorder %v403, %v364
          %vm476 = vcmp.eq.s32.totalorder %v375, %v365
          %vm477 = vcmp.eq.s32.totalorder %v379, %v365
          %vm478 = vcmp.eq.s32.totalorder %v383, %v365
          %vm479 = vcmp.eq.s32.totalorder %v387, %v365
          %vm480 = vcmp.eq.s32.totalorder %v391, %v365
          %vm481 = vcmp.eq.s32.totalorder %v395, %v365
          %vm482 = vcmp.eq.s32.totalorder %v399, %v365
          %vm483 = vcmp.eq.s32.totalorder %v403, %v365
          %vm484 = vcmp.eq.s32.totalorder %v375, %v366
          %vm485 = vcmp.eq.s32.totalorder %v379, %v366
          %vm486 = vcmp.eq.s32.totalorder %v383, %v366
          %vm487 = vcmp.eq.s32.totalorder %v387, %v366
          %vm488 = vcmp.eq.s32.totalorder %v391, %v366
          %vm489 = vcmp.eq.s32.totalorder %v395, %v366
          %vm490 = vcmp.eq.s32.totalorder %v399, %v366
          %vm491 = vcmp.eq.s32.totalorder %v403, %v366
          %vm492 = vcmp.eq.s32.totalorder %v375, %v367
          %vm493 = vcmp.eq.s32.totalorder %v379, %v367
          %vm494 = vcmp.eq.s32.totalorder %v383, %v367
          %vm495 = vcmp.eq.s32.totalorder %v387, %v367
          %vm496 = vcmp.eq.s32.totalorder %v391, %v367
          %vm497 = vcmp.eq.s32.totalorder %v395, %v367
          %vm498 = vcmp.eq.s32.totalorder %v399, %v367
          %vm499 = vcmp.eq.s32.totalorder %v403, %v367
          %vm500 = vcmp.eq.s32.totalorder %v375, %v368
          %vm501 = vcmp.eq.s32.totalorder %v379, %v368
          %vm502 = vcmp.eq.s32.totalorder %v383, %v368
          %vm503 = vcmp.eq.s32.totalorder %v387, %v368
          %vm504 = vcmp.eq.s32.totalorder %v391, %v368
          %vm505 = vcmp.eq.s32.totalorder %v395, %v368
          %vm506 = vcmp.eq.s32.totalorder %v399, %v368
          %vm507 = vcmp.eq.s32.totalorder %v403, %v368
          %vm508 = vcmp.eq.s32.totalorder %v375, %v369
          %vm509 = vcmp.eq.s32.totalorder %v379, %v369
          %vm510 = vcmp.eq.s32.totalorder %v383, %v369
          %vm511 = vcmp.eq.s32.totalorder %v387, %v369
          %vm512 = vcmp.eq.s32.totalorder %v391, %v369
          %vm513 = vcmp.eq.s32.totalorder %v395, %v369
          %vm514 = vcmp.eq.s32.totalorder %v399, %v369
          %vm515 = vcmp.eq.s32.totalorder %v403, %v369
          %vm516 = vcmp.eq.s32.totalorder %v375, %v370
          %vm517 = vcmp.eq.s32.totalorder %v379, %v370
          %vm518 = vcmp.eq.s32.totalorder %v383, %v370
          %vm519 = vcmp.eq.s32.totalorder %v387, %v370
          %vm520 = vcmp.eq.s32.totalorder %v391, %v370
          %vm521 = vcmp.eq.s32.totalorder %v395, %v370
          %vm522 = vcmp.eq.s32.totalorder %v399, %v370
          %vm523 = vcmp.eq.s32.totalorder %v403, %v370
          %vm524 = vcmp.eq.s32.totalorder %v375, %v371
          %vm525 = vcmp.eq.s32.totalorder %v379, %v371
          %vm526 = vcmp.eq.s32.totalorder %v383, %v371
          %vm527 = vcmp.eq.s32.totalorder %v387, %v371
          %vm528 = vcmp.eq.s32.totalorder %v391, %v371
          %vm529 = vcmp.eq.s32.totalorder %v395, %v371
          %vm530 = vcmp.eq.s32.totalorder %v399, %v371
          %vm531 = vcmp.eq.s32.totalorder %v403, %v371
          %v533 = vlaneseq
          %v534 = vshrl.u32 %v533, 7
          %v535 = vsub.s32 0, %v534
          %v536 = vrot.slane %v351, %v535
          %v537 = vlaneseq
          %v538 = vshrl.u32 %v537, 7
          %v539 = vsub.s32 1, %v538
          %v540 = vrot.slane %v351, %v539
          %v541 = vlaneseq
          %v542 = vshrl.u32 %v541, 7
          %v543 = vsub.s32 2, %v542
          %v544 = vrot.slane %v351, %v543
          %v545 = vlaneseq
          %v546 = vshrl.u32 %v545, 7
          %v547 = vsub.s32 3, %v546
          %v548 = vrot.slane %v351, %v547
          %v549 = vlaneseq
          %v550 = vshrl.u32 %v549, 7
          %v551 = vsub.s32 4, %v550
          %v552 = vrot.slane %v351, %v551
          %v553 = vlaneseq
          %v554 = vshrl.u32 %v553, 7
          %v555 = vsub.s32 5, %v554
          %v556 = vrot.slane %v351, %v555
          %v557 = vlaneseq
          %v558 = vshrl.u32 %v557, 7
          %v559 = vsub.s32 6, %v558
          %v560 = vrot.slane %v351, %v559
          %v561 = vlaneseq
          %v562 = vshrl.u32 %v561, 7
          %v563 = vsub.s32 7, %v562
          %v564 = vrot.slane %v351, %v563
          %v573 = vsel %vm404, %v536, 0.0
          %v574 = vsel %vm405, %v540, 0.0
          %v575 = vsel %vm406, %v544, 0.0
          %v576 = vsel %vm407, %v548, 0.0
          %v577 = vsel %vm408, %v552, 0.0
          %v578 = vsel %vm409, %v556, 0.0
          %v579 = vsel %vm410, %v560, 0.0
          %v580 = vsel %vm411, %v564, 0.0
          %v581 = vsel %vm412, %v536, 0.0
          %v582 = vsel %vm413, %v540, 0.0
          %v583 = vsel %vm414, %v544, 0.0
          %v584 = vsel %vm415, %v548, 0.0
          %v585 = vsel %vm416, %v552, 0.0
          %v586 = vsel %vm417, %v556, 0.0
          %v587 = vsel %vm418, %v560, 0.0
          %v588 = vsel %vm419, %v564, 0.0
          %v589 = vsel %vm420, %v536, 0.0
          %v590 = vsel %vm421, %v540, 0.0
          %v591 = vsel %vm422, %v544, 0.0
          %v592 = vsel %vm423, %v548, 0.0
          %v593 = vsel %vm424, %v552, 0.0
          %v594 = vsel %vm425, %v556, 0.0
          %v595 = vsel %vm426, %v560, 0.0
          %v596 = vsel %vm427, %v564, 0.0
          %v597 = vsel %vm428, %v536, 0.0
          %v598 = vsel %vm429, %v540, 0.0
          %v599 = vsel %vm430, %v544, 0.0
          %v600 = vsel %vm431, %v548, 0.0
          %v601 = vsel %vm432, %v552, 0.0
          %v602 = vsel %vm433, %v556, 0.0
          %v603 = vsel %vm434, %v560, 0.0
          %v604 = vsel %vm435, %v564, 0.0
          %v605 = vsel %vm436, %v536, 0.0
          %v606 = vsel %vm437, %v540, 0.0
          %v607 = vsel %vm438, %v544, 0.0
          %v608 = vsel %vm439, %v548, 0.0
          %v609 = vsel %vm440, %v552, 0.0
          %v610 = vsel %vm441, %v556, 0.0
          %v611 = vsel %vm442, %v560, 0.0
          %v612 = vsel %vm443, %v564, 0.0
          %v613 = vsel %vm444, %v536, 0.0
          %v614 = vsel %vm445, %v540, 0.0
          %v615 = vsel %vm446, %v544, 0.0
          %v616 = vsel %vm447, %v548, 0.0
          %v617 = vsel %vm448, %v552, 0.0
          %v618 = vsel %vm449, %v556, 0.0
          %v619 = vsel %vm450, %v560, 0.0
          %v620 = vsel %vm451, %v564, 0.0
          %v621 = vsel %vm452, %v536, 0.0
          %v622 = vsel %vm453, %v540, 0.0
          %v623 = vsel %vm454, %v544, 0.0
          %v624 = vsel %vm455, %v548, 0.0
          %v625 = vsel %vm456, %v552, 0.0
          %v626 = vsel %vm457, %v556, 0.0
          %v627 = vsel %vm458, %v560, 0.0
          %v628 = vsel %vm459, %v564, 0.0
          %v629 = vsel %vm460, %v536, 0.0
          %v630 = vsel %vm461, %v540, 0.0
          %v631 = vsel %vm462, %v544, 0.0
          %v632 = vsel %vm463, %v548, 0.0
          %v633 = vsel %vm464, %v552, 0.0
          %v634 = vsel %vm465, %v556, 0.0
          %v635 = vsel %vm466, %v560, 0.0
          %v636 = vsel %vm467, %v564, 0.0
          %v637 = vsel %vm468, %v536, 0.0
          %v638 = vsel %vm469, %v540, 0.0
          %v639 = vsel %vm470, %v544, 0.0
          %v640 = vsel %vm471, %v548, 0.0
          %v641 = vsel %vm472, %v552, 0.0
          %v642 = vsel %vm473, %v556, 0.0
          %v643 = vsel %vm474, %v560, 0.0
          %v644 = vsel %vm475, %v564, 0.0
          %v645 = vsel %vm476, %v536, 0.0
          %v646 = vsel %vm477, %v540, 0.0
          %v647 = vsel %vm478, %v544, 0.0
          %v648 = vsel %vm479, %v548, 0.0
          %v649 = vsel %vm480, %v552, 0.0
          %v650 = vsel %vm481, %v556, 0.0
          %v651 = vsel %vm482, %v560, 0.0
          %v652 = vsel %vm483, %v564, 0.0
          %v653 = vsel %vm484, %v536, 0.0
          %v654 = vsel %vm485, %v540, 0.0
          %v655 = vsel %vm486, %v544, 0.0
          %v656 = vsel %vm487, %v548, 0.0
          %v657 = vsel %vm488, %v552, 0.0
          %v658 = vsel %vm489, %v556, 0.0
          %v659 = vsel %vm490, %v560, 0.0
          %v660 = vsel %vm491, %v564, 0.0
          %v661 = vsel %vm492, %v536, 0.0
          %v662 = vsel %vm493, %v540, 0.0
          %v663 = vsel %vm494, %v544, 0.0
          %v664 = vsel %vm495, %v548, 0.0
          %v665 = vsel %vm496, %v552, 0.0
          %v666 = vsel %vm497, %v556, 0.0
          %v667 = vsel %vm498, %v560, 0.0
          %v668 = vsel %vm499, %v564, 0.0
          %v669 = vsel %vm500, %v536, 0.0
          %v670 = vsel %vm501, %v540, 0.0
          %v671 = vsel %vm502, %v544, 0.0
          %v672 = vsel %vm503, %v548, 0.0
          %v673 = vsel %vm504, %v552, 0.0
          %v674 = vsel %vm505, %v556, 0.0
          %v675 = vsel %vm506, %v560, 0.0
          %v676 = vsel %vm507, %v564, 0.0
          %v677 = vsel %vm508, %v536, 0.0
          %v678 = vsel %vm509, %v540, 0.0
          %v679 = vsel %vm510, %v544, 0.0
          %v680 = vsel %vm511, %v548, 0.0
          %v681 = vsel %vm512, %v552, 0.0
          %v682 = vsel %vm513, %v556, 0.0
          %v683 = vsel %vm514, %v560, 0.0
          %v684 = vsel %vm515, %v564, 0.0
          %v685 = vsel %vm516, %v536, 0.0
          %v686 = vsel %vm517, %v540, 0.0
          %v687 = vsel %vm518, %v544, 0.0
          %v688 = vsel %vm519, %v548, 0.0
          %v689 = vsel %vm520, %v552, 0.0
          %v690 = vsel %vm521, %v556, 0.0
          %v691 = vsel %vm522, %v560, 0.0
          %v692 = vsel %vm523, %v564, 0.0
          %v693 = vsel %vm524, %v536, 0.0
          %v694 = vsel %vm525, %v540, 0.0
          %v695 = vsel %vm526, %v544, 0.0
          %v696 = vsel %vm527, %v548, 0.0
          %v697 = vsel %vm528, %v552, 0.0
          %v698 = vsel %vm529, %v556, 0.0
          %v699 = vsel %vm530, %v560, 0.0
          %v700 = vsel %vm531, %v564, 0.0
          %v701 = vld [vmem:[%s310] sm:$0xff]
          %v702 = vld [vmem:[%s310 + $0x8] sm:$0xff]
          %v703 = vld [vmem:[%s310 + $0x10] sm:$0xff]
          %v704 = vld [vmem:[%s310 + $0x18] sm:$0xff]
          %v705 = vld [vmem:[%s310 + $0x20] sm:$0xff]
          %v706 = vld [vmem:[%s310 + $0x28] sm:$0xff]
          %v707 = vld [vmem:[%s310 + $0x30] sm:$0xff]
          %v708 = vld [vmem:[%s310 + $0x38] sm:$0xff]
          %v709 = vld [vmem:[%s310 + $0x40] sm:$0xff]
          %v710 = vld [vmem:[%s310 + $0x48] sm:$0xff]
          %v711 = vld [vmem:[%s310 + $0x50] sm:$0xff]
          %v712 = vld [vmem:[%s310 + $0x58] sm:$0xff]
          %v713 = vld [vmem:[%s310 + $0x60] sm:$0xff]
          %v714 = vld [vmem:[%s310 + $0x68] sm:$0xff]
          %v715 = vld [vmem:[%s310 + $0x70] sm:$0xff]
          %v716 = vld [vmem:[%s310 + $0x78] sm:$0xff]
          %v717 = vpack.c.bf16 %v581, %v573
          %v718 = vpack.c.bf16 %v582, %v574
          %v719 = vpack.c.bf16 %v583, %v575
          %v720 = vpack.c.bf16 %v584, %v576
          %v721 = vpack.c.bf16 %v585, %v577
          %v722 = vpack.c.bf16 %v586, %v578
          %v723 = vpack.c.bf16 %v587, %v579
          %v724 = vpack.c.bf16 %v588, %v580
          %v725 = vpack.c.bf16 %v597, %v589
          %v726 = vpack.c.bf16 %v598, %v590
          %v727 = vpack.c.bf16 %v599, %v591
          %v728 = vpack.c.bf16 %v600, %v592
          %v729 = vpack.c.bf16 %v601, %v593
          %v730 = vpack.c.bf16 %v602, %v594
          %v731 = vpack.c.bf16 %v603, %v595
          %v732 = vpack.c.bf16 %v604, %v596
          %v733 = vpack.c.bf16 %v613, %v605
          %v734 = vpack.c.bf16 %v614, %v606
          %v735 = vpack.c.bf16 %v615, %v607
          %v736 = vpack.c.bf16 %v616, %v608
          %v737 = vpack.c.bf16 %v617, %v609
          %v738 = vpack.c.bf16 %v618, %v610
          %v739 = vpack.c.bf16 %v619, %v611
          %v740 = vpack.c.bf16 %v620, %v612
          %v741 = vpack.c.bf16 %v629, %v621
          %v742 = vpack.c.bf16 %v630, %v622
          %v743 = vpack.c.bf16 %v631, %v623
          %v744 = vpack.c.bf16 %v632, %v624
          %v745 = vpack.c.bf16 %v633, %v625
          %v746 = vpack.c.bf16 %v634, %v626
          %v747 = vpack.c.bf16 %v635, %v627
          %v748 = vpack.c.bf16 %v636, %v628
          %v749 = vpack.c.bf16 %v645, %v637
          %v750 = vpack.c.bf16 %v646, %v638
          %v751 = vpack.c.bf16 %v647, %v639
          %v752 = vpack.c.bf16 %v648, %v640
          %v753 = vpack.c.bf16 %v649, %v641
          %v754 = vpack.c.bf16 %v650, %v642
          %v755 = vpack.c.bf16 %v651, %v643
          %v756 = vpack.c.bf16 %v652, %v644
          %v757 = vpack.c.bf16 %v661, %v653
          %v758 = vpack.c.bf16 %v662, %v654
          %v759 = vpack.c.bf16 %v663, %v655
          %v760 = vpack.c.bf16 %v664, %v656
          %v761 = vpack.c.bf16 %v665, %v657
          %v762 = vpack.c.bf16 %v666, %v658
          %v763 = vpack.c.bf16 %v667, %v659
          %v764 = vpack.c.bf16 %v668, %v660
          %v765 = vpack.c.bf16 %v677, %v669
          %v766 = vpack.c.bf16 %v678, %v670
          %v767 = vpack.c.bf16 %v679, %v671
          %v768 = vpack.c.bf16 %v680, %v672
          %v769 = vpack.c.bf16 %v681, %v673
          %v770 = vpack.c.bf16 %v682, %v674
          %v771 = vpack.c.bf16 %v683, %v675
          %v772 = vpack.c.bf16 %v684, %v676
          %v773 = vpack.c.bf16 %v693, %v685
          %v774 = vpack.c.bf16 %v694, %v686
          %v775 = vpack.c.bf16 %v695, %v687
          %v776 = vpack.c.bf16 %v696, %v688
          %v777 = vpack.c.bf16 %v697, %v689
          %v778 = vpack.c.bf16 %v698, %v690
          %v779 = vpack.c.bf16 %v699, %v691
          %v780 = vpack.c.bf16 %v700, %v692
          %v781 = vld [vmem:[%s278] sm:$0xf]
          %v782 = vld [vmem:[%s278 + $0x4] sm:$0xf]
          %v783 = vld [vmem:[%s278 + $0x8] sm:$0xf]
          %v784 = vld [vmem:[%s278 + $0xc] sm:$0xf]
          %v785 = vld [vmem:[%s278 + $0x10] sm:$0xf]
          %v786 = vld [vmem:[%s278 + $0x14] sm:$0xf]
          %v787 = vld [vmem:[%s278 + $0x18] sm:$0xf]
          %v788 = vld [vmem:[%s278 + $0x1c] sm:$0xf]
          %v789 = vld [vmem:[%s278 + $0x20] sm:$0xf]
          %v790 = vld [vmem:[%s278 + $0x24] sm:$0xf]
          %v791 = vld [vmem:[%s278 + $0x28] sm:$0xf]
          %v792 = vld [vmem:[%s278 + $0x2c] sm:$0xf]
          %v793 = vld [vmem:[%s278 + $0x30] sm:$0xf]
          %v794 = vld [vmem:[%s278 + $0x34] sm:$0xf]
          %v795 = vld [vmem:[%s278 + $0x38] sm:$0xf]
          %v796 = vld [vmem:[%s278 + $0x3c] sm:$0xf]
          %v797 = vld [vmem:[%s278 + $0x40] sm:$0xf]
          %v798 = vld [vmem:[%s278 + $0x44] sm:$0xf]
          %v799 = vld [vmem:[%s278 + $0x48] sm:$0xf]
          %v800 = vld [vmem:[%s278 + $0x4c] sm:$0xf]
          %v801 = vld [vmem:[%s278 + $0x50] sm:$0xf]
          %v802 = vld [vmem:[%s278 + $0x54] sm:$0xf]
          %v803 = vld [vmem:[%s278 + $0x58] sm:$0xf]
          %v804 = vld [vmem:[%s278 + $0x5c] sm:$0xf]
          %v805 = vld [vmem:[%s278 + $0x60] sm:$0xf]
          %v806 = vld [vmem:[%s278 + $0x64] sm:$0xf]
          %v807 = vld [vmem:[%s278 + $0x68] sm:$0xf]
          %v808 = vld [vmem:[%s278 + $0x6c] sm:$0xf]
          %v809 = vld [vmem:[%s278 + $0x70] sm:$0xf]
          %v810 = vld [vmem:[%s278 + $0x74] sm:$0xf]
          %v811 = vld [vmem:[%s278 + $0x78] sm:$0xf]
          %v812 = vld [vmem:[%s278 + $0x7c] sm:$0xf]
          %v813 = vld [vmem:[%s278 + $0x80] sm:$0xf]
          %v814 = vld [vmem:[%s278 + $0x84] sm:$0xf]
          %v815 = vld [vmem:[%s278 + $0x88] sm:$0xf]
          %v816 = vld [vmem:[%s278 + $0x8c] sm:$0xf]
          %v817 = vld [vmem:[%s278 + $0x90] sm:$0xf]
          %v818 = vld [vmem:[%s278 + $0x94] sm:$0xf]
          %v819 = vld [vmem:[%s278 + $0x98] sm:$0xf]
          %v820 = vld [vmem:[%s278 + $0x9c] sm:$0xf]
          %v821 = vld [vmem:[%s278 + $0xa0] sm:$0xf]
          %v822 = vld [vmem:[%s278 + $0xa4] sm:$0xf]
          %v823 = vld [vmem:[%s278 + $0xa8] sm:$0xf]
          %v824 = vld [vmem:[%s278 + $0xac] sm:$0xf]
          %v825 = vld [vmem:[%s278 + $0xb0] sm:$0xf]
          %v826 = vld [vmem:[%s278 + $0xb4] sm:$0xf]
          %v827 = vld [vmem:[%s278 + $0xb8] sm:$0xf]
          %v828 = vld [vmem:[%s278 + $0xbc] sm:$0xf]
          %v829 = vld [vmem:[%s278 + $0xc0] sm:$0xf]
          %v830 = vld [vmem:[%s278 + $0xc4] sm:$0xf]
          %v831 = vld [vmem:[%s278 + $0xc8] sm:$0xf]
          %v832 = vld [vmem:[%s278 + $0xcc] sm:$0xf]
          %v833 = vld [vmem:[%s278 + $0xd0] sm:$0xf]
          %v834 = vld [vmem:[%s278 + $0xd4] sm:$0xf]
          %v835 = vld [vmem:[%s278 + $0xd8] sm:$0xf]
          %v836 = vld [vmem:[%s278 + $0xdc] sm:$0xf]
          %v837 = vld [vmem:[%s278 + $0xe0] sm:$0xf]
          %v838 = vld [vmem:[%s278 + $0xe4] sm:$0xf]
          %v839 = vld [vmem:[%s278 + $0xe8] sm:$0xf]
          %v840 = vld [vmem:[%s278 + $0xec] sm:$0xf]
          %v841 = vld [vmem:[%s278 + $0xf0] sm:$0xf]
          %v842 = vld [vmem:[%s278 + $0xf4] sm:$0xf]
          %v843 = vld [vmem:[%s278 + $0xf8] sm:$0xf]
          %v844 = vld [vmem:[%s278 + $0xfc] sm:$0xf]
          %v845 = vld [vmem:[%s278 + $0x100] sm:$0xf]
          %v846 = vld [vmem:[%s278 + $0x104] sm:$0xf]
          %v847 = vld [vmem:[%s278 + $0x108] sm:$0xf]
          %v848 = vld [vmem:[%s278 + $0x10c] sm:$0xf]
          %v849 = vld [vmem:[%s278 + $0x110] sm:$0xf]
          %v850 = vld [vmem:[%s278 + $0x114] sm:$0xf]
          %v851 = vld [vmem:[%s278 + $0x118] sm:$0xf]
          %v852 = vld [vmem:[%s278 + $0x11c] sm:$0xf]
          %v853 = vld [vmem:[%s278 + $0x120] sm:$0xf]
          %v854 = vld [vmem:[%s278 + $0x124] sm:$0xf]
          %v855 = vld [vmem:[%s278 + $0x128] sm:$0xf]
          %v856 = vld [vmem:[%s278 + $0x12c] sm:$0xf]
          %v857 = vld [vmem:[%s278 + $0x130] sm:$0xf]
          %v858 = vld [vmem:[%s278 + $0x134] sm:$0xf]
          %v859 = vld [vmem:[%s278 + $0x138] sm:$0xf]
          %v860 = vld [vmem:[%s278 + $0x13c] sm:$0xf]
          %v861 = vld [vmem:[%s278 + $0x140] sm:$0xf]
          %v862 = vld [vmem:[%s278 + $0x144] sm:$0xf]
          %v863 = vld [vmem:[%s278 + $0x148] sm:$0xf]
          %v864 = vld [vmem:[%s278 + $0x14c] sm:$0xf]
          %v865 = vld [vmem:[%s278 + $0x150] sm:$0xf]
          %v866 = vld [vmem:[%s278 + $0x154] sm:$0xf]
          %v867 = vld [vmem:[%s278 + $0x158] sm:$0xf]
          %v868 = vld [vmem:[%s278 + $0x15c] sm:$0xf]
          %v869 = vld [vmem:[%s278 + $0x160] sm:$0xf]
          %v870 = vld [vmem:[%s278 + $0x164] sm:$0xf]
          %v871 = vld [vmem:[%s278 + $0x168] sm:$0xf]
          %v872 = vld [vmem:[%s278 + $0x16c] sm:$0xf]
          %v873 = vld [vmem:[%s278 + $0x170] sm:$0xf]
          %v874 = vld [vmem:[%s278 + $0x174] sm:$0xf]
          %v875 = vld [vmem:[%s278 + $0x178] sm:$0xf]
          %v876 = vld [vmem:[%s278 + $0x17c] sm:$0xf]
          %v877 = vld [vmem:[%s278 + $0x180] sm:$0xf]
          %v878 = vld [vmem:[%s278 + $0x184] sm:$0xf]
          %v879 = vld [vmem:[%s278 + $0x188] sm:$0xf]
          %v880 = vld [vmem:[%s278 + $0x18c] sm:$0xf]
          %v881 = vld [vmem:[%s278 + $0x190] sm:$0xf]
          %v882 = vld [vmem:[%s278 + $0x194] sm:$0xf]
          %v883 = vld [vmem:[%s278 + $0x198] sm:$0xf]
          %v884 = vld [vmem:[%s278 + $0x19c] sm:$0xf]
          %v885 = vld [vmem:[%s278 + $0x1a0] sm:$0xf]
          %v886 = vld [vmem:[%s278 + $0x1a4] sm:$0xf]
          %v887 = vld [vmem:[%s278 + $0x1a8] sm:$0xf]
          %v888 = vld [vmem:[%s278 + $0x1ac] sm:$0xf]
          %v889 = vld [vmem:[%s278 + $0x1b0] sm:$0xf]
          %v890 = vld [vmem:[%s278 + $0x1b4] sm:$0xf]
          %v891 = vld [vmem:[%s278 + $0x1b8] sm:$0xf]
          %v892 = vld [vmem:[%s278 + $0x1bc] sm:$0xf]
          %v893 = vld [vmem:[%s278 + $0x1c0] sm:$0xf]
          %v894 = vld [vmem:[%s278 + $0x1c4] sm:$0xf]
          %v895 = vld [vmem:[%s278 + $0x1c8] sm:$0xf]
          %v896 = vld [vmem:[%s278 + $0x1cc] sm:$0xf]
          %v897 = vld [vmem:[%s278 + $0x1d0] sm:$0xf]
          %v898 = vld [vmem:[%s278 + $0x1d4] sm:$0xf]
          %v899 = vld [vmem:[%s278 + $0x1d8] sm:$0xf]
          %v900 = vld [vmem:[%s278 + $0x1dc] sm:$0xf]
          %v901 = vld [vmem:[%s278 + $0x1e0] sm:$0xf]
          %v902 = vld [vmem:[%s278 + $0x1e4] sm:$0xf]
          %v903 = vld [vmem:[%s278 + $0x1e8] sm:$0xf]
          %v904 = vld [vmem:[%s278 + $0x1ec] sm:$0xf]
          %v905 = vld [vmem:[%s278 + $0x1f0] sm:$0xf]
          %v906 = vld [vmem:[%s278 + $0x1f4] sm:$0xf]
          %v907 = vld [vmem:[%s278 + $0x1f8] sm:$0xf]
          %v908 = vld [vmem:[%s278 + $0x1fc] sm:$0xf]
          %v1037 = vunpack.c.l.b16 %v781
          %v1038 = vunpack.c.l.b16 %v782
          %v1039 = vunpack.c.l.b16 %v783
          %v1040 = vunpack.c.l.b16 %v784
          %v1041 = vunpack.c.l.b16 %v785
          %v1042 = vunpack.c.l.b16 %v786
          %v1043 = vunpack.c.l.b16 %v787
          %v1044 = vunpack.c.l.b16 %v788
          %v1045 = vunpack.c.l.b16 %v789
          %v1046 = vunpack.c.l.b16 %v790
          %v1047 = vunpack.c.l.b16 %v791
          %v1048 = vunpack.c.l.b16 %v792
          %v1049 = vunpack.c.l.b16 %v793
          %v1050 = vunpack.c.l.b16 %v794
          %v1051 = vunpack.c.l.b16 %v795
          %v1052 = vunpack.c.l.b16 %v796
          %v1053 = vunpack.c.l.b16 %v797
          %v1054 = vunpack.c.l.b16 %v798
          %v1055 = vunpack.c.l.b16 %v799
          %v1056 = vunpack.c.l.b16 %v800
          %v1057 = vunpack.c.l.b16 %v801
          %v1058 = vunpack.c.l.b16 %v802
          %v1059 = vunpack.c.l.b16 %v803
          %v1060 = vunpack.c.l.b16 %v804
          %v1061 = vunpack.c.l.b16 %v805
          %v1062 = vunpack.c.l.b16 %v806
          %v1063 = vunpack.c.l.b16 %v807
          %v1064 = vunpack.c.l.b16 %v808
          %v1065 = vunpack.c.l.b16 %v809
          %v1066 = vunpack.c.l.b16 %v810
          %v1067 = vunpack.c.l.b16 %v811
          %v1068 = vunpack.c.l.b16 %v812
          %v1069 = vunpack.c.l.b16 %v813
          %v1070 = vunpack.c.l.b16 %v814
          %v1071 = vunpack.c.l.b16 %v815
          %v1072 = vunpack.c.l.b16 %v816
          %v1073 = vunpack.c.l.b16 %v817
          %v1074 = vunpack.c.l.b16 %v818
          %v1075 = vunpack.c.l.b16 %v819
          %v1076 = vunpack.c.l.b16 %v820
          %v1077 = vunpack.c.l.b16 %v821
          %v1078 = vunpack.c.l.b16 %v822
          %v1079 = vunpack.c.l.b16 %v823
          %v1080 = vunpack.c.l.b16 %v824
          %v1081 = vunpack.c.l.b16 %v825
          %v1082 = vunpack.c.l.b16 %v826
          %v1083 = vunpack.c.l.b16 %v827
          %v1084 = vunpack.c.l.b16 %v828
          %v1085 = vunpack.c.l.b16 %v829
          %v1086 = vunpack.c.l.b16 %v830
          %v1087 = vunpack.c.l.b16 %v831
          %v1088 = vunpack.c.l.b16 %v832
          %v1089 = vunpack.c.l.b16 %v833
          %v1090 = vunpack.c.l.b16 %v834
          %v1091 = vunpack.c.l.b16 %v835
          %v1092 = vunpack.c.l.b16 %v836
          %v1093 = vunpack.c.l.b16 %v837
          %v1094 = vunpack.c.l.b16 %v838
          %v1095 = vunpack.c.l.b16 %v839
          %v1096 = vunpack.c.l.b16 %v840
          %v1097 = vunpack.c.l.b16 %v841
          %v1098 = vunpack.c.l.b16 %v842
          %v1099 = vunpack.c.l.b16 %v843
          %v1100 = vunpack.c.l.b16 %v844
          %v1101 = vunpack.c.l.b16 %v845
          %v1102 = vunpack.c.l.b16 %v846
          %v1103 = vunpack.c.l.b16 %v847
          %v1104 = vunpack.c.l.b16 %v848
          %v1105 = vunpack.c.l.b16 %v849
          %v1106 = vunpack.c.l.b16 %v850
          %v1107 = vunpack.c.l.b16 %v851
          %v1108 = vunpack.c.l.b16 %v852
          %v1109 = vunpack.c.l.b16 %v853
          %v1110 = vunpack.c.l.b16 %v854
          %v1111 = vunpack.c.l.b16 %v855
          %v1112 = vunpack.c.l.b16 %v856
          %v1113 = vunpack.c.l.b16 %v857
          %v1114 = vunpack.c.l.b16 %v858
          %v1115 = vunpack.c.l.b16 %v859
          %v1116 = vunpack.c.l.b16 %v860
          %v1117 = vunpack.c.l.b16 %v861
          %v1118 = vunpack.c.l.b16 %v862
          %v1119 = vunpack.c.l.b16 %v863
          %v1120 = vunpack.c.l.b16 %v864
          %v1121 = vunpack.c.l.b16 %v865
          %v1122 = vunpack.c.l.b16 %v866
          %v1123 = vunpack.c.l.b16 %v867
          %v1124 = vunpack.c.l.b16 %v868
          %v1125 = vunpack.c.l.b16 %v869
          %v1126 = vunpack.c.l.b16 %v870
          %v1127 = vunpack.c.l.b16 %v871
          %v1128 = vunpack.c.l.b16 %v872
          %v1129 = vunpack.c.l.b16 %v873
          %v1130 = vunpack.c.l.b16 %v874
          %v1131 = vunpack.c.l.b16 %v875
          %v1132 = vunpack.c.l.b16 %v876
          %v1133 = vunpack.c.l.b16 %v877
          %v1134 = vunpack.c.l.b16 %v878
          %v1135 = vunpack.c.l.b16 %v879
          %v1136 = vunpack.c.l.b16 %v880
          %v1137 = vunpack.c.l.b16 %v881
          %v1138 = vunpack.c.l.b16 %v882
          %v1139 = vunpack.c.l.b16 %v883
          %v1140 = vunpack.c.l.b16 %v884
          %v1141 = vunpack.c.l.b16 %v885
          %v1142 = vunpack.c.l.b16 %v886
          %v1143 = vunpack.c.l.b16 %v887
          %v1144 = vunpack.c.l.b16 %v888
          %v1145 = vunpack.c.l.b16 %v889
          %v1146 = vunpack.c.l.b16 %v890
          %v1147 = vunpack.c.l.b16 %v891
          %v1148 = vunpack.c.l.b16 %v892
          %v1149 = vunpack.c.l.b16 %v893
          %v1150 = vunpack.c.l.b16 %v894
          %v1151 = vunpack.c.l.b16 %v895
          %v1152 = vunpack.c.l.b16 %v896
          %v1153 = vunpack.c.l.b16 %v897
          %v1154 = vunpack.c.l.b16 %v898
          %v1155 = vunpack.c.l.b16 %v899
          %v1156 = vunpack.c.l.b16 %v900
          %v1157 = vunpack.c.l.b16 %v901
          %v1158 = vunpack.c.l.b16 %v902
          %v1159 = vunpack.c.l.b16 %v903
          %v1160 = vunpack.c.l.b16 %v904
          %v1161 = vunpack.c.l.b16 %v905
          %v1162 = vunpack.c.l.b16 %v906
          %v1163 = vunpack.c.l.b16 %v907
          %v1164 = vunpack.c.l.b16 %v908
          %v1165 = vpack.c.b16 %v1038, %v1037
          %v1166 = vpack.c.b16 %v1040, %v1039
          %v1167 = vpack.c.b16 %v1042, %v1041
          %v1168 = vpack.c.b16 %v1044, %v1043
          %v1169 = vpack.c.b16 %v1046, %v1045
          %v1170 = vpack.c.b16 %v1048, %v1047
          %v1171 = vpack.c.b16 %v1050, %v1049
          %v1172 = vpack.c.b16 %v1052, %v1051
          %v1173 = vpack.c.b16 %v1054, %v1053
          %v1174 = vpack.c.b16 %v1056, %v1055
          %v1175 = vpack.c.b16 %v1058, %v1057
          %v1176 = vpack.c.b16 %v1060, %v1059
          %v1177 = vpack.c.b16 %v1062, %v1061
          %v1178 = vpack.c.b16 %v1064, %v1063
          %v1179 = vpack.c.b16 %v1066, %v1065
          %v1180 = vpack.c.b16 %v1068, %v1067
          %v1181 = vpack.c.b16 %v1070, %v1069
          %v1182 = vpack.c.b16 %v1072, %v1071
          %v1183 = vpack.c.b16 %v1074, %v1073
          %v1184 = vpack.c.b16 %v1076, %v1075
          %v1185 = vpack.c.b16 %v1078, %v1077
          %v1186 = vpack.c.b16 %v1080, %v1079
          %v1187 = vpack.c.b16 %v1082, %v1081
          %v1188 = vpack.c.b16 %v1084, %v1083
          %v1189 = vpack.c.b16 %v1086, %v1085
          %v1190 = vpack.c.b16 %v1088, %v1087
          %v1191 = vpack.c.b16 %v1090, %v1089
          %v1192 = vpack.c.b16 %v1092, %v1091
          %v1193 = vpack.c.b16 %v1094, %v1093
          %v1194 = vpack.c.b16 %v1096, %v1095
          %v1195 = vpack.c.b16 %v1098, %v1097
          %v1196 = vpack.c.b16 %v1100, %v1099
          %v1197 = vpack.c.b16 %v1102, %v1101
          %v1198 = vpack.c.b16 %v1104, %v1103
          %v1199 = vpack.c.b16 %v1106, %v1105
          %v1200 = vpack.c.b16 %v1108, %v1107
          %v1201 = vpack.c.b16 %v1110, %v1109
          %v1202 = vpack.c.b16 %v1112, %v1111
          %v1203 = vpack.c.b16 %v1114, %v1113
          %v1204 = vpack.c.b16 %v1116, %v1115
          %v1205 = vpack.c.b16 %v1118, %v1117
          %v1206 = vpack.c.b16 %v1120, %v1119
          %v1207 = vpack.c.b16 %v1122, %v1121
          %v1208 = vpack.c.b16 %v1124, %v1123
          %v1209 = vpack.c.b16 %v1126, %v1125
          %v1210 = vpack.c.b16 %v1128, %v1127
          %v1211 = vpack.c.b16 %v1130, %v1129
          %v1212 = vpack.c.b16 %v1132, %v1131
          %v1213 = vpack.c.b16 %v1134, %v1133
          %v1214 = vpack.c.b16 %v1136, %v1135
          %v1215 = vpack.c.b16 %v1138, %v1137
          %v1216 = vpack.c.b16 %v1140, %v1139
          %v1217 = vpack.c.b16 %v1142, %v1141
          %v1218 = vpack.c.b16 %v1144, %v1143
          %v1219 = vpack.c.b16 %v1146, %v1145
          %v1220 = vpack.c.b16 %v1148, %v1147
          %v1221 = vpack.c.b16 %v1150, %v1149
          %v1222 = vpack.c.b16 %v1152, %v1151
          %v1223 = vpack.c.b16 %v1154, %v1153
          %v1224 = vpack.c.b16 %v1156, %v1155
          %v1225 = vpack.c.b16 %v1158, %v1157
          %v1226 = vpack.c.b16 %v1160, %v1159
          %v1227 = vpack.c.b16 %v1162, %v1161
          %v1228 = vpack.c.b16 %v1164, %v1163
          %1293 = vmatprep.subr.bf16.mxu0 0
          %1294 = vmatpush1.bf16.msra.mxu0 %v1172
          %1295 = vmatprep.subr.bf16.mxu0 0
          %1296 = vmatpush1.bf16.msra.mxu0 %v1171
          %1297 = vmatprep.subr.bf16.mxu0 0
          %1298 = vmatpush1.bf16.msra.mxu0 %v1170
          %1299 = vmatprep.subr.bf16.mxu0 0
          %1300 = vmatpush1.bf16.msra.mxu0 %v1169
          %1301 = vmatprep.subr.bf16.mxu0 0
          %1302 = vmatpush1.bf16.msra.mxu0 %v1168
          %1303 = vmatprep.subr.bf16.mxu0 0
          %1304 = vmatpush1.bf16.msra.mxu0 %v1167
          %1305 = vmatprep.subr.bf16.mxu0 0
          %1306 = vmatpush1.bf16.msra.mxu0 %v1166
          %1307 = vmatprep.subr.bf16.mxu0 0
          %1308 = vmatpush1.bf16.msra.mxu0 %v1165
          %1309 = vmatprep.subr.bf16.mxu0 0
          %1310 = vmatpush2.bf16.msra.mxu0 %v1180
          %1311 = vmatprep.subr.bf16.mxu0 0
          %1312 = vmatpush2.bf16.msra.mxu0 %v1179
          %1313 = vmatprep.subr.bf16.mxu0 0
          %1314 = vmatpush2.bf16.msra.mxu0 %v1178
          %1315 = vmatprep.subr.bf16.mxu0 0
          %1316 = vmatpush2.bf16.msra.mxu0 %v1177
          %1317 = vmatprep.subr.bf16.mxu0 0
          %1318 = vmatpush2.bf16.msra.mxu0 %v1176
          %1319 = vmatprep.subr.bf16.mxu0 0
          %1320 = vmatpush2.bf16.msra.mxu0 %v1175
          %1321 = vmatprep.subr.bf16.mxu0 0
          %1322 = vmatpush2.bf16.msra.mxu0 %v1174
          %1323 = vmatprep.subr.bf16.mxu0 0
          %1324 = vmatpush2.bf16.msra.mxu0 %v1173
          %1325 = vmatprep.mubr.bf16.mxu0 %v718
          %1326 = vmatmul.mubr.bf16.gmra.mxu0 %v717
          %v1327 = vpop.f32.mrf.mxu0
          %v1328 = vadd.f32 0.0, %v1327
          %v1329 = vpop.f32.mrf.mxu0
          %v1330 = vpop.f32.mrf.mxu0
          %v1331 = vadd.f32 0.0, %v1330
          %v1332 = vpop.f32.mrf.mxu0
          %1333 = vmatprep.mubr.bf16.mxu0 %v726
          %1334 = vmatmul.mubr.bf16.gmra.mxu0 %v725
          %v1335 = vpop.f32.mrf.mxu0
          %v1336 = vadd.f32 0.0, %v1335
          %v1337 = vpop.f32.mrf.mxu0
          %v1338 = vpop.f32.mrf.mxu0
          %v1339 = vadd.f32 0.0, %v1338
          %v1340 = vpop.f32.mrf.mxu0
          %1341 = vmatprep.mubr.bf16.mxu0 %v734
          %1342 = vmatmul.mubr.bf16.gmra.mxu0 %v733
          %v1343 = vpop.f32.mrf.mxu0
          %v1344 = vadd.f32 0.0, %v1343
          %v1345 = vpop.f32.mrf.mxu0
          %v1346 = vpop.f32.mrf.mxu0
          %v1347 = vadd.f32 0.0, %v1346
          %v1348 = vpop.f32.mrf.mxu0
          %1349 = vmatprep.mubr.bf16.mxu0 %v742
          %1350 = vmatmul.mubr.bf16.gmra.mxu0 %v741
          %v1351 = vpop.f32.mrf.mxu0
          %v1352 = vadd.f32 0.0, %v1351
          %v1353 = vpop.f32.mrf.mxu0
          %v1354 = vpop.f32.mrf.mxu0
          %v1355 = vadd.f32 0.0, %v1354
          %v1356 = vpop.f32.mrf.mxu0
          %1357 = vmatprep.mubr.bf16.mxu0 %v750
          %1358 = vmatmul.mubr.bf16.gmra.mxu0 %v749
          %v1359 = vpop.f32.mrf.mxu0
          %v1360 = vadd.f32 0.0, %v1359
          %v1361 = vpop.f32.mrf.mxu0
          %v1362 = vpop.f32.mrf.mxu0
          %v1363 = vadd.f32 0.0, %v1362
          %v1364 = vpop.f32.mrf.mxu0
          %1365 = vmatprep.mubr.bf16.mxu0 %v758
          %1366 = vmatmul.mubr.bf16.gmra.mxu0 %v757
          %v1367 = vpop.f32.mrf.mxu0
          %v1368 = vadd.f32 0.0, %v1367
          %v1369 = vpop.f32.mrf.mxu0
          %v1370 = vpop.f32.mrf.mxu0
          %v1371 = vadd.f32 0.0, %v1370
          %v1372 = vpop.f32.mrf.mxu0
          %1373 = vmatprep.mubr.bf16.mxu0 %v766
          %1374 = vmatmul.mubr.bf16.gmra.mxu0 %v765
          %v1375 = vpop.f32.mrf.mxu0
          %v1376 = vadd.f32 0.0, %v1375
          %v1377 = vpop.f32.mrf.mxu0
          %v1378 = vpop.f32.mrf.mxu0
          %v1379 = vadd.f32 0.0, %v1378
          %v1380 = vpop.f32.mrf.mxu0
          %1381 = vmatprep.mubr.bf16.mxu0 %v774
          %1382 = vmatmul.mubr.bf16.gmra.mxu0 %v773
          %v1383 = vpop.f32.mrf.mxu0
          %v1384 = vadd.f32 0.0, %v1383
          %v1385 = vpop.f32.mrf.mxu0
          %v1386 = vpop.f32.mrf.mxu0
          %v1387 = vadd.f32 0.0, %v1386
          %v1388 = vpop.f32.mrf.mxu0
          %1389 = vdwg.mxu0
          %1390 = vmatprep.subr.bf16.mxu0 0
          %1391 = vmatpush1.bf16.msra.mxu0 %v1188
          %1392 = vmatprep.subr.bf16.mxu0 0
          %1393 = vmatpush1.bf16.msra.mxu0 %v1187
          %1394 = vmatprep.subr.bf16.mxu0 0
          %1395 = vmatpush1.bf16.msra.mxu0 %v1186
          %1396 = vmatprep.subr.bf16.mxu0 0
          %1397 = vmatpush1.bf16.msra.mxu0 %v1185
          %1398 = vmatprep.subr.bf16.mxu0 0
          %1399 = vmatpush1.bf16.msra.mxu0 %v1184
          %1400 = vmatprep.subr.bf16.mxu0 0
          %1401 = vmatpush1.bf16.msra.mxu0 %v1183
          %1402 = vmatprep.subr.bf16.mxu0 0
          %1403 = vmatpush1.bf16.msra.mxu0 %v1182
          %1404 = vmatprep.subr.bf16.mxu0 0
          %1405 = vmatpush1.bf16.msra.mxu0 %v1181
          %1406 = vmatprep.subr.bf16.mxu0 0
          %1407 = vmatpush2.bf16.msra.mxu0 %v1196
          %1408 = vmatprep.subr.bf16.mxu0 0
          %1409 = vmatpush2.bf16.msra.mxu0 %v1195
          %1410 = vmatprep.subr.bf16.mxu0 0
          %1411 = vmatpush2.bf16.msra.mxu0 %v1194
          %1412 = vmatprep.subr.bf16.mxu0 0
          %1413 = vmatpush2.bf16.msra.mxu0 %v1193
          %1414 = vmatprep.subr.bf16.mxu0 0
          %1415 = vmatpush2.bf16.msra.mxu0 %v1192
          %1416 = vmatprep.subr.bf16.mxu0 0
          %1417 = vmatpush2.bf16.msra.mxu0 %v1191
          %1418 = vmatprep.subr.bf16.mxu0 0
          %1419 = vmatpush2.bf16.msra.mxu0 %v1190
          %1420 = vmatprep.subr.bf16.mxu0 0
          %1421 = vmatpush2.bf16.msra.mxu0 %v1189
          %1422 = vmatprep.mubr.bf16.mxu0 %v720
          %1423 = vmatmul.mubr.bf16.gmra.mxu0 %v719
          %v1424 = vpop.f32.mrf.mxu0
          %v1425 = vadd.f32 %v1328, %v1424
          %v1426 = vpop.f32.mrf.mxu0
          %v1427 = vpop.f32.mrf.mxu0
          %v1428 = vadd.f32 %v1331, %v1427
          %v1429 = vpop.f32.mrf.mxu0
          %1430 = vmatprep.mubr.bf16.mxu0 %v728
          %1431 = vmatmul.mubr.bf16.gmra.mxu0 %v727
          %v1432 = vpop.f32.mrf.mxu0
          %v1433 = vadd.f32 %v1336, %v1432
          %v1434 = vpop.f32.mrf.mxu0
          %v1435 = vpop.f32.mrf.mxu0
          %v1436 = vadd.f32 %v1339, %v1435
          %v1437 = vpop.f32.mrf.mxu0
          %1438 = vmatprep.mubr.bf16.mxu0 %v736
          %1439 = vmatmul.mubr.bf16.gmra.mxu0 %v735
          %v1440 = vpop.f32.mrf.mxu0
          %v1441 = vadd.f32 %v1344, %v1440
          %v1442 = vpop.f32.mrf.mxu0
          %v1443 = vpop.f32.mrf.mxu0
          %v1444 = vadd.f32 %v1347, %v1443
          %v1445 = vpop.f32.mrf.mxu0
          %1446 = vmatprep.mubr.bf16.mxu0 %v744
          %1447 = vmatmul.mubr.bf16.gmra.mxu0 %v743
          %v1448 = vpop.f32.mrf.mxu0
          %v1449 = vadd.f32 %v1352, %v1448
          %v1450 = vpop.f32.mrf.mxu0
          %v1451 = vpop.f32.mrf.mxu0
          %v1452 = vadd.f32 %v1355, %v1451
          %v1453 = vpop.f32.mrf.mxu0
          %1454 = vmatprep.mubr.bf16.mxu0 %v752
          %1455 = vmatmul.mubr.bf16.gmra.mxu0 %v751
          %v1456 = vpop.f32.mrf.mxu0
          %v1457 = vadd.f32 %v1360, %v1456
          %v1458 = vpop.f32.mrf.mxu0
          %v1459 = vpop.f32.mrf.mxu0
          %v1460 = vadd.f32 %v1363, %v1459
          %v1461 = vpop.f32.mrf.mxu0
          %1462 = vmatprep.mubr.bf16.mxu0 %v760
          %1463 = vmatmul.mubr.bf16.gmra.mxu0 %v759
          %v1464 = vpop.f32.mrf.mxu0
          %v1465 = vadd.f32 %v1368, %v1464
          %v1466 = vpop.f32.mrf.mxu0
          %v1467 = vpop.f32.mrf.mxu0
          %v1468 = vadd.f32 %v1371, %v1467
          %v1469 = vpop.f32.mrf.mxu0
          %1470 = vmatprep.mubr.bf16.mxu0 %v768
          %1471 = vmatmul.mubr.bf16.gmra.mxu0 %v767
          %v1472 = vpop.f32.mrf.mxu0
          %v1473 = vadd.f32 %v1376, %v1472
          %v1474 = vpop.f32.mrf.mxu0
          %v1475 = vpop.f32.mrf.mxu0
          %v1476 = vadd.f32 %v1379, %v1475
          %v1477 = vpop.f32.mrf.mxu0
          %1478 = vmatprep.mubr.bf16.mxu0 %v776
          %1479 = vmatmul.mubr.bf16.gmra.mxu0 %v775
          %v1480 = vpop.f32.mrf.mxu0
          %v1481 = vadd.f32 %v1384, %v1480
          %v1482 = vpop.f32.mrf.mxu0
          %v1483 = vpop.f32.mrf.mxu0
          %v1484 = vadd.f32 %v1387, %v1483
          %v1485 = vpop.f32.mrf.mxu0
          %1486 = vdwg.mxu0
          %1487 = vmatprep.subr.bf16.mxu0 0
          %1488 = vmatpush1.bf16.msra.mxu0 %v1204
          %1489 = vmatprep.subr.bf16.mxu0 0
          %1490 = vmatpush1.bf16.msra.mxu0 %v1203
          %1491 = vmatprep.subr.bf16.mxu0 0
          %1492 = vmatpush1.bf16.msra.mxu0 %v1202
          %1493 = vmatprep.subr.bf16.mxu0 0
          %1494 = vmatpush1.bf16.msra.mxu0 %v1201
          %1495 = vmatprep.subr.bf16.mxu0 0
          %1496 = vmatpush1.bf16.msra.mxu0 %v1200
          %1497 = vmatprep.subr.bf16.mxu0 0
          %1498 = vmatpush1.bf16.msra.mxu0 %v1199
          %1499 = vmatprep.subr.bf16.mxu0 0
          %1500 = vmatpush1.bf16.msra.mxu0 %v1198
          %1501 = vmatprep.subr.bf16.mxu0 0
          %1502 = vmatpush1.bf16.msra.mxu0 %v1197
          %1503 = vmatprep.subr.bf16.mxu0 0
          %1504 = vmatpush2.bf16.msra.mxu0 %v1212
          %1505 = vmatprep.subr.bf16.mxu0 0
          %1506 = vmatpush2.bf16.msra.mxu0 %v1211
          %1507 = vmatprep.subr.bf16.mxu0 0
          %1508 = vmatpush2.bf16.msra.mxu0 %v1210
          %1509 = vmatprep.subr.bf16.mxu0 0
          %1510 = vmatpush2.bf16.msra.mxu0 %v1209
          %1511 = vmatprep.subr.bf16.mxu0 0
          %1512 = vmatpush2.bf16.msra.mxu0 %v1208
          %1513 = vmatprep.subr.bf16.mxu0 0
          %1514 = vmatpush2.bf16.msra.mxu0 %v1207
          %1515 = vmatprep.subr.bf16.mxu0 0
          %1516 = vmatpush2.bf16.msra.mxu0 %v1206
          %1517 = vmatprep.subr.bf16.mxu0 0
          %1518 = vmatpush2.bf16.msra.mxu0 %v1205
          %1519 = vmatprep.mubr.bf16.mxu0 %v722
          %1520 = vmatmul.mubr.bf16.gmra.mxu0 %v721
          %v1521 = vpop.f32.mrf.mxu0
          %v1522 = vadd.f32 %v1425, %v1521
          %v1523 = vpop.f32.mrf.mxu0
          %v1524 = vpop.f32.mrf.mxu0
          %v1525 = vadd.f32 %v1428, %v1524
          %v1526 = vpop.f32.mrf.mxu0
          %1527 = vmatprep.mubr.bf16.mxu0 %v730
          %1528 = vmatmul.mubr.bf16.gmra.mxu0 %v729
          %v1529 = vpop.f32.mrf.mxu0
          %v1530 = vadd.f32 %v1433, %v1529
          %v1531 = vpop.f32.mrf.mxu0
          %v1532 = vpop.f32.mrf.mxu0
          %v1533 = vadd.f32 %v1436, %v1532
          %v1534 = vpop.f32.mrf.mxu0
          %1535 = vmatprep.mubr.bf16.mxu0 %v738
          %1536 = vmatmul.mubr.bf16.gmra.mxu0 %v737
          %v1537 = vpop.f32.mrf.mxu0
          %v1538 = vadd.f32 %v1441, %v1537
          %v1539 = vpop.f32.mrf.mxu0
          %v1540 = vpop.f32.mrf.mxu0
          %v1541 = vadd.f32 %v1444, %v1540
          %v1542 = vpop.f32.mrf.mxu0
          %1543 = vmatprep.mubr.bf16.mxu0 %v746
          %1544 = vmatmul.mubr.bf16.gmra.mxu0 %v745
          %v1545 = vpop.f32.mrf.mxu0
          %v1546 = vadd.f32 %v1449, %v1545
          %v1547 = vpop.f32.mrf.mxu0
          %v1548 = vpop.f32.mrf.mxu0
          %v1549 = vadd.f32 %v1452, %v1548
          %v1550 = vpop.f32.mrf.mxu0
          %1551 = vmatprep.mubr.bf16.mxu0 %v754
          %1552 = vmatmul.mubr.bf16.gmra.mxu0 %v753
          %v1553 = vpop.f32.mrf.mxu0
          %v1554 = vadd.f32 %v1457, %v1553
          %v1555 = vpop.f32.mrf.mxu0
          %v1556 = vpop.f32.mrf.mxu0
          %v1557 = vadd.f32 %v1460, %v1556
          %v1558 = vpop.f32.mrf.mxu0
          %1559 = vmatprep.mubr.bf16.mxu0 %v762
          %1560 = vmatmul.mubr.bf16.gmra.mxu0 %v761
          %v1561 = vpop.f32.mrf.mxu0
          %v1562 = vadd.f32 %v1465, %v1561
          %v1563 = vpop.f32.mrf.mxu0
          %v1564 = vpop.f32.mrf.mxu0
          %v1565 = vadd.f32 %v1468, %v1564
          %v1566 = vpop.f32.mrf.mxu0
          %1567 = vmatprep.mubr.bf16.mxu0 %v770
          %1568 = vmatmul.mubr.bf16.gmra.mxu0 %v769
          %v1569 = vpop.f32.mrf.mxu0
          %v1570 = vadd.f32 %v1473, %v1569
          %v1571 = vpop.f32.mrf.mxu0
          %v1572 = vpop.f32.mrf.mxu0
          %v1573 = vadd.f32 %v1476, %v1572
          %v1574 = vpop.f32.mrf.mxu0
          %1575 = vmatprep.mubr.bf16.mxu0 %v778
          %1576 = vmatmul.mubr.bf16.gmra.mxu0 %v777
          %v1577 = vpop.f32.mrf.mxu0
          %v1578 = vadd.f32 %v1481, %v1577
          %v1579 = vpop.f32.mrf.mxu0
          %v1580 = vpop.f32.mrf.mxu0
          %v1581 = vadd.f32 %v1484, %v1580
          %v1582 = vpop.f32.mrf.mxu0
          %1583 = vdwg.mxu0
          %1584 = vmatprep.subr.bf16.mxu0 0
          %1585 = vmatpush1.bf16.msra.mxu0 %v1220
          %1586 = vmatprep.subr.bf16.mxu0 0
          %1587 = vmatpush1.bf16.msra.mxu0 %v1219
          %1588 = vmatprep.subr.bf16.mxu0 0
          %1589 = vmatpush1.bf16.msra.mxu0 %v1218
          %1590 = vmatprep.subr.bf16.mxu0 0
          %1591 = vmatpush1.bf16.msra.mxu0 %v1217
          %1592 = vmatprep.subr.bf16.mxu0 0
          %1593 = vmatpush1.bf16.msra.mxu0 %v1216
          %1594 = vmatprep.subr.bf16.mxu0 0
          %1595 = vmatpush1.bf16.msra.mxu0 %v1215
          %1596 = vmatprep.subr.bf16.mxu0 0
          %1597 = vmatpush1.bf16.msra.mxu0 %v1214
          %1598 = vmatprep.subr.bf16.mxu0 0
          %1599 = vmatpush1.bf16.msra.mxu0 %v1213
          %1600 = vmatprep.subr.bf16.mxu0 0
          %1601 = vmatpush2.bf16.msra.mxu0 %v1228
          %1602 = vmatprep.subr.bf16.mxu0 0
          %1603 = vmatpush2.bf16.msra.mxu0 %v1227
          %1604 = vmatprep.subr.bf16.mxu0 0
          %1605 = vmatpush2.bf16.msra.mxu0 %v1226
          %1606 = vmatprep.subr.bf16.mxu0 0
          %1607 = vmatpush2.bf16.msra.mxu0 %v1225
          %1608 = vmatprep.subr.bf16.mxu0 0
          %1609 = vmatpush2.bf16.msra.mxu0 %v1224
          %1610 = vmatprep.subr.bf16.mxu0 0
          %1611 = vmatpush2.bf16.msra.mxu0 %v1223
          %1612 = vmatprep.subr.bf16.mxu0 0
          %1613 = vmatpush2.bf16.msra.mxu0 %v1222
          %1614 = vmatprep.subr.bf16.mxu0 0
          %1615 = vmatpush2.bf16.msra.mxu0 %v1221
          %1616 = vmatprep.mubr.bf16.mxu0 %v724
          %1617 = vmatmul.mubr.bf16.gmra.mxu0 %v723
          %v1618 = vpop.f32.mrf.mxu0
          %v1619 = vadd.f32 %v1522, %v1618
          %v1620 = vpop.f32.mrf.mxu0
          %v1621 = vpop.f32.mrf.mxu0
          %v1622 = vadd.f32 %v1525, %v1621
          %v1623 = vpop.f32.mrf.mxu0
          %1624 = vmatprep.mubr.bf16.mxu0 %v732
          %1625 = vmatmul.mubr.bf16.gmra.mxu0 %v731
          %v1626 = vpop.f32.mrf.mxu0
          %v1627 = vadd.f32 %v1530, %v1626
          %v1628 = vpop.f32.mrf.mxu0
          %v1629 = vpop.f32.mrf.mxu0
          %v1630 = vadd.f32 %v1533, %v1629
          %v1631 = vpop.f32.mrf.mxu0
          %1632 = vmatprep.mubr.bf16.mxu0 %v740
          %1633 = vmatmul.mubr.bf16.gmra.mxu0 %v739
          %v1634 = vpop.f32.mrf.mxu0
          %v1635 = vadd.f32 %v1538, %v1634
          %v1636 = vpop.f32.mrf.mxu0
          %v1637 = vpop.f32.mrf.mxu0
          %v1638 = vadd.f32 %v1541, %v1637
          %v1639 = vpop.f32.mrf.mxu0
          %1640 = vmatprep.mubr.bf16.mxu0 %v748
          %1641 = vmatmul.mubr.bf16.gmra.mxu0 %v747
          %v1642 = vpop.f32.mrf.mxu0
          %v1643 = vadd.f32 %v1546, %v1642
          %v1644 = vpop.f32.mrf.mxu0
          %v1645 = vpop.f32.mrf.mxu0
          %v1646 = vadd.f32 %v1549, %v1645
          %v1647 = vpop.f32.mrf.mxu0
          %1648 = vmatprep.mubr.bf16.mxu0 %v756
          %1649 = vmatmul.mubr.bf16.gmra.mxu0 %v755
          %v1650 = vpop.f32.mrf.mxu0
          %v1651 = vadd.f32 %v1554, %v1650
          %v1652 = vpop.f32.mrf.mxu0
          %v1653 = vpop.f32.mrf.mxu0
          %v1654 = vadd.f32 %v1557, %v1653
          %v1655 = vpop.f32.mrf.mxu0
          %1656 = vmatprep.mubr.bf16.mxu0 %v764
          %1657 = vmatmul.mubr.bf16.gmra.mxu0 %v763
          %v1658 = vpop.f32.mrf.mxu0
          %v1659 = vadd.f32 %v1562, %v1658
          %v1660 = vpop.f32.mrf.mxu0
          %v1661 = vpop.f32.mrf.mxu0
          %v1662 = vadd.f32 %v1565, %v1661
          %v1663 = vpop.f32.mrf.mxu0
          %1664 = vmatprep.mubr.bf16.mxu0 %v772
          %1665 = vmatmul.mubr.bf16.gmra.mxu0 %v771
          %v1666 = vpop.f32.mrf.mxu0
          %v1667 = vadd.f32 %v1570, %v1666
          %v1668 = vpop.f32.mrf.mxu0
          %v1669 = vpop.f32.mrf.mxu0
          %v1670 = vadd.f32 %v1573, %v1669
          %v1671 = vpop.f32.mrf.mxu0
          %1672 = vmatprep.mubr.bf16.mxu0 %v780
          %1673 = vmatmul.mubr.bf16.gmra.mxu0 %v779
          %v1674 = vpop.f32.mrf.mxu0
          %v1675 = vadd.f32 %v1578, %v1674
          %v1676 = vpop.f32.mrf.mxu0
          %v1677 = vpop.f32.mrf.mxu0
          %v1678 = vadd.f32 %v1581, %v1677
          %v1679 = vpop.f32.mrf.mxu0
          %1680 = vdwg.mxu0
          %v1681 = vadd.f32 %v701, %v1619
          %v1682 = vadd.f32 %v702, %v1622
          %v1683 = vadd.f32 %v703, %v1627
          %v1684 = vadd.f32 %v704, %v1630
          %v1685 = vadd.f32 %v705, %v1635
          %v1686 = vadd.f32 %v706, %v1638
          %v1687 = vadd.f32 %v707, %v1643
          %v1688 = vadd.f32 %v708, %v1646
          %v1689 = vadd.f32 %v709, %v1651
          %v1690 = vadd.f32 %v710, %v1654
          %v1691 = vadd.f32 %v711, %v1659
          %v1692 = vadd.f32 %v712, %v1662
          %v1693 = vadd.f32 %v713, %v1667
          %v1694 = vadd.f32 %v714, %v1670
          %v1695 = vadd.f32 %v715, %v1675
          %v1696 = vadd.f32 %v716, %v1678
          %1697 = vst [vmem:[%s310] sm:$0xff] %v1681
          %1698 = vst [vmem:[%s310 + $0x8] sm:$0xff] %v1682
          %1699 = vst [vmem:[%s310 + $0x10] sm:$0xff] %v1683
          %1700 = vst [vmem:[%s310 + $0x18] sm:$0xff] %v1684
          %1701 = vst [vmem:[%s310 + $0x20] sm:$0xff] %v1685
          %1702 = vst [vmem:[%s310 + $0x28] sm:$0xff] %v1686
          %1703 = vst [vmem:[%s310 + $0x30] sm:$0xff] %v1687
          %1704 = vst [vmem:[%s310 + $0x38] sm:$0xff] %v1688
          %1705 = vst [vmem:[%s310 + $0x40] sm:$0xff] %v1689
          %1706 = vst [vmem:[%s310 + $0x48] sm:$0xff] %v1690
          %1707 = vst [vmem:[%s310 + $0x50] sm:$0xff] %v1691
          %1708 = vst [vmem:[%s310 + $0x58] sm:$0xff] %v1692
          %1709 = vst [vmem:[%s310 + $0x60] sm:$0xff] %v1693
          %1710 = vst [vmem:[%s310 + $0x68] sm:$0xff] %v1694
          %1711 = vst [vmem:[%s310 + $0x70] sm:$0xff] %v1695
          %1712 = vst [vmem:[%s310 + $0x78] sm:$0xff] %v1696
        $region52: #{tpu_custom_call.1} parent=31 // pred_fallthru
          _
        %s1713 = sand.u32 %s149, 1
        %s1714 = scalar_lea.sflag [#allocation7], %s1713
        %s1715 = sand.u32 %s149, 1
        %s1716 = smul.addr %s1715, 128
        %s1717 = scalar_lea.vmem [#allocation11], %s1716
        // Predicated region
        $region53: #{tpu_custom_call.1} parent=31 // pred_check
          %p1718 = pneg %p159
        $region54: #{tpu_custom_call.1} parent=31 // pred_check_branch
          %1720 = sbr.rel (%p1718) target = $region56
        $region55: #{tpu_custom_call.1} parent=31 // pred_region
          %s1721 = smul.u32 16, %s37
          %s1723 = ssub.s32 2048, 2048
          %1724 = vsyncadd %s1714, %s1723
          %s1725 = smul.addr %s1721, 128
          %s1726 = scalar_lea.hbm %s5, %s1725
          %s1727 = sshll.u32 %s1717, 4
          %s1728 = int_to_ptr.vmem [resolvable:$true] %s1727
          %1733 = dma.vmem_to_hbm [thread:$0]  %s1728, 2048, %s1726, %s1714, 128, 128, 8
        $region56: #{tpu_custom_call.1} parent=31 // pred_fallthru
          _
      $region32: #{tpu_custom_call.1} parent=5 // pred_fallthru
        _
      %p1734 = scmp.le.s32.totalorder 2, %s28
      // Predicated region
      $region57: #{tpu_custom_call.1} parent=5 // pred_check
        %p1735 = pneg %p1734
      $region58: #{tpu_custom_call.1} parent=5 // pred_check_branch
        %1737 = sbr.rel (%p1735) target = $region60
      $region59: #{tpu_custom_call.1} parent=5 // pred_region
        %s1738 = ssub.s32 %s28, 2
        // Predicated region
        $region61: #{tpu_custom_call.1} parent=59 // pred_check
          %p1739 = pneg %p165
        $region62: #{tpu_custom_call.1} parent=59 // pred_check_branch
          %1741 = sbr.rel (%p1739) target = $region64
        $region63: #{tpu_custom_call.1} parent=59 // pred_region
          %s1742 = sand.u32 %s150, 1
          %s1743 = scalar_lea.sflag [#allocation7], %s1742
          %s1744 = sand.u32 %s150, 1
          %s1745 = smul.addr %s1744, 128
          %s1746 = scalar_lea.vmem [#allocation11], %s1745
          %1747 = dma.done %s1743, 2048
        $region64: #{tpu_custom_call.1} parent=59 // pred_fallthru
          _
      $region60: #{tpu_custom_call.1} parent=5 // pred_fallthru
        _
    $region6: #{tpu_custom_call.1} parent=1 // loop_footer
      %s32 = sadd.s32 1, %s28
    $region7: #{tpu_custom_call.1} parent=1 // loop_footer_branch
      %27 = sbr.rel target = $region3
    $region8: #{tpu_custom_call.1} parent=1 // loop_exit
      _
    %1748 = vsyncpa [#allocation6], 1
    %s1749 = scalar_lea.sflag [#allocation6], 1
    %1750 = vsyncpa %s1749, 1
    %1751 = vsyncpa [#allocation9], 1
    %s1752 = scalar_lea.sflag [#allocation9], 1
    %1753 = vsyncpa %s1752, 1
    %1754 = vsyncpa [#allocation7], 1
    %s1755 = scalar_lea.sflag [#allocation7], 1
    %1756 = vsyncpa %s1755, 1

</llo_original>
